<compile_context>
chip_gen: v7x
topology: tpu7x:2x2x1
jax: 0.10.0
libtpu: 0.0.40
codegen_flags: <defaults>
</compile_context>

<pallas_src>
import math

import jax
import jax.numpy as jnp
from jax import lax
from jax.experimental import pallas as pl
from jax.experimental.pallas import tpu as pltpu


def _bilstm_kernel(x_ref, wih_ref, b_ref, whh_ref, out_ref, gx_ref):
    """Fused bidirectional LSTM. out = [B, 2H] = [final fwd h | final bwd h].

    Gate-lane layout (8H wide, direction-major, activation-type-major inside
    a direction): [g_f i_f f_f o_f | g_b i_b f_b o_b].
    """
    SB, _ = x_ref.shape          # SB = S * B
    B = out_ref.shape[0]
    S = SB // B
    H2 = whh_ref.shape[0]        # 2H
    H = H2 // 2
    H4 = 4 * H
    H8 = 8 * H

    # Loop-invariant weight loads, hoisted out of the recurrence.
    Wih = wih_ref[...]           # [D, 8H]   both directions fused
    bias = b_ref[...]            # [1, 8H]   b_ih + b_hh, both directions
    Whh = whh_ref[...]           # [2H, 8H]  block-diagonal (fwd | bwd)

    # ---- Input projection for every timestep and both directions as ONE
    # lane-dense MXU matmul, off the serial recurrent chain. ----
    gx_ref[...] = (
        jnp.dot(x_ref[...], Wih, preferred_element_type=jnp.float32) + bias
    )

    # ---- Serial recurrence: one fused block-diagonal matmul and slab-wise
    # activations per step; h/c carried in registers (lane-concatenated). ----
    def step(t, carry):
        h_cat, c_cat = carry                                   # [B, 2H] each
        fwd_row = pl.multiple_of(t * B, 8)
        bwd_row = pl.multiple_of((S - 1 - t) * B, 8)
        g_f = gx_ref[pl.ds(fwd_row, B), 0:H4]                  # fwd gates of x[t]
        g_b = gx_ref[pl.ds(bwd_row, B), H4:H8]                 # bwd gates of x[S-1-t]
        gates = (jnp.concatenate([g_f, g_b], axis=-1)
                 + jnp.dot(h_cat, Whh, preferred_element_type=jnp.float32))

        # Activation-type-major slabs: one tanh + one sigmoid per direction.
        gt_f = jnp.tanh(gates[:, 0:H])
        sig_f = jax.nn.sigmoid(gates[:, H:H4])                 # [i_f f_f o_f]
        gt_b = jnp.tanh(gates[:, H4:H4 + H])
        sig_b = jax.nn.sigmoid(gates[:, H4 + H:H8])            # [i_b f_b o_b]

        c_f = sig_f[:, H:2 * H] * c_cat[:, 0:H] + sig_f[:, 0:H] * gt_f
        c_b = sig_b[:, H:2 * H] * c_cat[:, H:H2] + sig_b[:, 0:H] * gt_b
        c_new = jnp.concatenate([c_f, c_b], axis=-1)           # [B, 2H]
        o_cat = jnp.concatenate([sig_f[:, 2 * H:3 * H],
                                 sig_b[:, 2 * H:3 * H]], axis=-1)
        h_new = o_cat * jnp.tanh(c_new)                        # one EUP pass, both dirs
        return h_new, c_new

    zeros = jnp.zeros((B, H2), jnp.float32)   # PyTorch default h0 = c0 = 0
    h_cat, _ = lax.fori_loop(0, S, step, (zeros, zeros), unroll=(S <= 32))

    # Single lane-dense store: [B, 2H] == hn.transpose(0,1).view(B, -1).
    out_ref[...] = h_cat


def encoder_forward(x, reorder, params):
    """x: [B, S, D] batch-first (like nn.LSTM(batch_first=True)); reorder: int32 [B]."""
    B, S, D = x.shape
    H = params["w_hh_f"].shape[1]
    B_pad = ((B + 7) // 8) * 8                 # pad batch (sublanes) to multiple of 8

    x_tm = jnp.swapaxes(x, 0, 1)               # time-major [S, B, D]
    if B_pad != B:
        x_tm = jnp.pad(x_tm, ((0, 0), (0, B_pad - B), (0, 0)))
    x2d = x_tm.reshape(S * B_pad, D)           # single lane-dense matmul operand

    flops = 2 * S * B_pad * 8 * H * (D + 2 * H)
    transcendentals = 10 * S * B_pad * H
    bytes_accessed = 4 * (S * B_pad * D + D * 8 * H + 2 * H * 8 * H
                          + 8 * H + B_pad * 2 * H)

    out = pl.pallas_call(
        _bilstm_kernel,
        out_shape=jax.ShapeDtypeStruct((B_pad, 2 * H), jnp.float32),
        in_specs=[pl.BlockSpec(memory_space=pltpu.MemorySpace.VMEM)] * 4,
        out_specs=pl.BlockSpec(memory_space=pltpu.MemorySpace.VMEM),
        scratch_shapes=[pltpu.VMEM((S * B_pad, 8 * H), jnp.float32)],  # gx
        cost_estimate=pl.CostEstimate(
            flops=flops, transcendentals=transcendentals,
            bytes_accessed=bytes_accessed),
    )(x2d, params["wih"], params["b"], params["whh_blk"])

    out = out[:B]                              # drop batch padding
    return out[reorder]                        # trivial row gather outside the kernel


def init_params(key, input_dim, lstm_dim):
    """nn.LSTM-style init (uniform(-1/sqrt(H), 1/sqrt(H))) in PyTorch layouts,
    plus lane-dense packed copies consumed by the kernel."""
    k = 1.0 / math.sqrt(lstm_dim)
    keys = jax.random.split(key, 8)
    H = lstm_dim

    def u(k_, shape):
        return jax.random.uniform(k_, shape, jnp.float32, -k, k)

    # PyTorch layouts: weight_ih [4H, D], weight_hh [4H, H], biases [4H];
    # gate row order i, f, g, o.
    raw = dict(
        w_ih_f=u(keys[0], (4 * H, input_dim)), w_hh_f=u(keys[1], (4 * H, H)),
        b_ih_f=u(keys[2], (4 * H,)), b_hh_f=u(keys[3], (4 * H,)),
        w_ih_b=u(keys[4], (4 * H, input_dim)), w_hh_b=u(keys[5], (4 * H, H)),
        b_ih_b=u(keys[6], (4 * H,)), b_hh_b=u(keys[7], (4 * H,)),
    )

    # Kernel gate order is [g, i, f, o] (activation-type-major slabs).
    perm = jnp.concatenate([jnp.arange(2 * H, 3 * H),    # g
                            jnp.arange(0, H),            # i
                            jnp.arange(H, 2 * H),        # f
                            jnp.arange(3 * H, 4 * H)])   # o

    wih = jnp.concatenate([raw["w_ih_f"][perm].T,
                           raw["w_ih_b"][perm].T], axis=1)           # [D, 8H]
    b = jnp.concatenate([(raw["b_ih_f"] + raw["b_hh_f"])[perm],
                         (raw["b_ih_b"] + raw["b_hh_b"])[perm]]
                        ).reshape(1, 8 * H)                          # [1, 8H]
    whh_blk = jnp.zeros((2 * H, 8 * H), jnp.float32)                 # block-diag
    whh_blk = whh_blk.at[:H, :4 * H].set(raw["w_hh_f"][perm].T)      # fwd block
    whh_blk = whh_blk.at[H:, 4 * H:].set(raw["w_hh_b"][perm].T)      # bwd block

    return dict(raw, wih=wih, b=b, whh_blk=whh_blk)


def encoder_reference(x, reorder, params):
    """Pure-JAX reference of the bidirectional LSTM final hidden states."""
    B, S, D = x.shape
    H = params["w_hh_f"].shape[1]

    def run_dir(x_tm, w_ih, w_hh, b_ih, b_hh):
        def step(carry, xt):
            h, c = carry
            gates = xt @ w_ih.T + h @ w_hh.T + b_ih + b_hh
            i = jax.nn.sigmoid(gates[:, 0:H])
            f = jax.nn.sigmoid(gates[:, H:2 * H])
            g = jnp.tanh(gates[:, 2 * H:3 * H])
            o = jax.nn.sigmoid(gates[:, 3 * H:4 * H])
            c = f * c + i * g
            h = o * jnp.tanh(c)
            return (h, c), None

        z = jnp.zeros((B, H), jnp.float32)
        (h, _), _ = lax.scan(step, (z, z), x_tm)
        return h

    x_tm = jnp.swapaxes(x, 0, 1)
    h_fwd = run_dir(x_tm, params["w_ih_f"], params["w_hh_f"],
                    params["b_ih_f"], params["b_hh_f"])
    h_bwd = run_dir(x_tm[::-1], params["w_ih_b"], params["w_hh_b"],
                    params["b_ih_b"], params["b_hh_b"])
    out = jnp.concatenate([h_fwd, h_bwd], axis=-1)
    return out[reorder]


if __name__ == "__main__":
    B, S, D, H = 4, 8, 32, 32   # batch, seq, input_dim, lstm_dim
    key = jax.random.PRNGKey(0)
    kx, kp, kr = jax.random.split(key, 3)

    x = jax.random.normal(kx, (B, S, D), jnp.float32)
    reorder = jax.random.permutation(kr, jnp.arange(B, dtype=jnp.int32))
    params = init_params(kp, D, H)

    out = jax.block_until_ready(encoder_forward(x, reorder, params))
    ref = encoder_reference(x, reorder, params)

    assert out.shape == (B, 2 * H), out.shape
    max_err = float(jnp.max(jnp.abs(out - ref)))
    assert jnp.allclose(out, ref, atol=1e-5, rtol=1e-5), max_err
    print("KERNEL_OK")
</pallas_src>

<mosaic_0001>
module attributes {stable_mosaic.version = 11 : i64} {
  func.func @_bilstm_kernel(%arg0: memref<64x32xf32, #tpu.memory_space<vmem>>, %arg1: memref<32x256xf32, #tpu.memory_space<vmem>>, %arg2: memref<1x256xf32, #tpu.memory_space<vmem>>, %arg3: memref<64x256xf32, #tpu.memory_space<vmem>>, %arg4: memref<8x64xf32, #tpu.memory_space<vmem>>, %arg5: memref<64x256xf32, #tpu.memory_space<vmem>>) attributes {dimension_semantics = [], scalar_prefetch = 0 : i64, scratch_operands = 1 : i64, tpu.core_type = #tpu.core_type<tc>} {
    %c0 = arith.constant 0 : index
    %c0_0 = arith.constant 0 : index
    %0 = vector.load %arg1[%c0, %c0_0] : memref<32x256xf32, #tpu.memory_space<vmem>>, vector<32x256xf32>
    %c0_1 = arith.constant 0 : index
    %c0_2 = arith.constant 0 : index
    %1 = vector.load %arg2[%c0_1, %c0_2] : memref<1x256xf32, #tpu.memory_space<vmem>>, vector<1x256xf32>
    %c0_3 = arith.constant 0 : index
    %c0_4 = arith.constant 0 : index
    %2 = vector.load %arg3[%c0_3, %c0_4] : memref<64x256xf32, #tpu.memory_space<vmem>>, vector<64x256xf32>
    %c0_5 = arith.constant 0 : index
    %c0_6 = arith.constant 0 : index
    %3 = vector.load %arg0[%c0_5, %c0_6] : memref<64x32xf32, #tpu.memory_space<vmem>>, vector<64x32xf32>
    %cst = arith.constant dense<0.000000e+00> : vector<64x256xf32>
    %4 = tpu.matmul %3, %0, %cst {dimension_numbers = #tpu.dot_dimension_numbers<[1], [0], [0], [1], [0, 0, 1, 1], [], []>} : vector<64x32xf32>, vector<32x256xf32>, vector<64x256xf32> -> vector<64x256xf32>
    %5 = vector.broadcast %1 : vector<1x256xf32> to vector<64x256xf32>
    %6 = arith.addf %4, %5 : vector<64x256xf32>
    %c0_7 = arith.constant 0 : index
    %c0_8 = arith.constant 0 : index
    %7 = vector.load %arg5[%c0_7, %c0_8] : memref<64x256xf32, #tpu.memory_space<vmem>>, vector<64x256xf32>
    tpu.vector_store %arg5[%c0_7, %c0_8], %6 {strides = array<i32>} : memref<64x256xf32, #tpu.memory_space<vmem>>, vector<64x256xf32>,
    %cst_9 = arith.constant 0.000000e+00 : f32
    %8 = vector.broadcast %cst_9 : f32 to vector<8x64xf32>
    %c0_i32 = arith.constant 0 : i32
    %c8_i32 = arith.constant 8 : i32
    %9 = arith.muli %c0_i32, %c8_i32 : i32
    %10 = tpu.assume_multiple %9, 8 : i32
    %c7_i32 = arith.constant 7 : i32
    %11 = arith.subi %c7_i32, %c0_i32 : i32
    %c8_i32_10 = arith.constant 8 : i32
    %12 = arith.muli %11, %c8_i32_10 : i32
    %13 = tpu.assume_multiple %12, 8 : i32
    %14 = arith.index_cast %10 : i32 to index
    %c0_11 = arith.constant 0 : index
    %15 = vector.load %arg5[%14, %c0_11] : memref<64x256xf32, #tpu.memory_space<vmem>>, vector<8x128xf32>
    %16 = arith.index_cast %13 : i32 to index
    %c128 = arith.constant 128 : index
    %17 = vector.load %arg5[%16, %c128] : memref<64x256xf32, #tpu.memory_space<vmem>>, vector<8x128xf32>
    %18 = tpu.concatenate %15, %17 in 1 : vector<8x128xf32>, vector<8x128xf32> -> vector<8x256xf32>
    %cst_12 = arith.constant dense<0.000000e+00> : vector<8x256xf32>
    %19 = tpu.matmul %8, %2, %cst_12 {dimension_numbers = #tpu.dot_dimension_numbers<[1], [0], [0], [1], [0, 0, 1, 1], [], []>} : vector<8x64xf32>, vector<64x256xf32>, vector<8x256xf32> -> vector<8x256xf32>
    %20 = arith.addf %18, %19 : vector<8x256xf32>
    %21 = vector.extract_strided_slice %20 {offsets = [0, 0], sizes = [8, 32], strides = [1, 1]} : vector<8x256xf32> to vector<8x32xf32>
    %22 = math.tanh %21 : vector<8x32xf32>
    %23 = vector.extract_strided_slice %20 {offsets = [0, 32], sizes = [8, 96], strides = [1, 1]} : vector<8x256xf32> to vector<8x96xf32>
    %24 = arith.negf %23 : vector<8x96xf32>
    %25 = math.exp %24 : vector<8x96xf32>
    %cst_13 = arith.constant 1.000000e+00 : f32
    %26 = vector.broadcast %cst_13 : f32 to vector<8x96xf32>
    %27 = arith.addf %26, %25 : vector<8x96xf32>
    %28 = arith.divf %26, %27 : vector<8x96xf32>
    %29 = vector.extract_strided_slice %20 {offsets = [0, 128], sizes = [8, 32], strides = [1, 1]} : vector<8x256xf32> to vector<8x32xf32>
    %30 = math.tanh %29 : vector<8x32xf32>
    %31 = vector.extract_strided_slice %20 {offsets = [0, 160], sizes = [8, 96], strides = [1, 1]} : vector<8x256xf32> to vector<8x96xf32>
    %32 = arith.negf %31 : vector<8x96xf32>
    %33 = math.exp %32 : vector<8x96xf32>
    %cst_14 = arith.constant 1.000000e+00 : f32
    %34 = vector.broadcast %cst_14 : f32 to vector<8x96xf32>
    %35 = arith.addf %34, %33 : vector<8x96xf32>
    %36 = arith.divf %34, %35 : vector<8x96xf32>
    %37 = vector.extract_strided_slice %28 {offsets = [0, 32], sizes = [8, 32], strides = [1, 1]} : vector<8x96xf32> to vector<8x32xf32>
    %38 = vector.extract_strided_slice %8 {offsets = [0, 0], sizes = [8, 32], strides = [1, 1]} : vector<8x64xf32> to vector<8x32xf32>
    %39 = arith.mulf %37, %38 : vector<8x32xf32>
    %40 = vector.extract_strided_slice %28 {offsets = [0, 0], sizes = [8, 32], strides = [1, 1]} : vector<8x96xf32> to vector<8x32xf32>
    %41 = arith.mulf %40, %22 : vector<8x32xf32>
    %42 = arith.addf %39, %41 : vector<8x32xf32>
    %43 = vector.extract_strided_slice %36 {offsets = [0, 32], sizes = [8, 32], strides = [1, 1]} : vector<8x96xf32> to vector<8x32xf32>
    %44 = vector.extract_strided_slice %8 {offsets = [0, 32], sizes = [8, 32], strides = [1, 1]} : vector<8x64xf32> to vector<8x32xf32>
    %45 = arith.mulf %43, %44 : vector<8x32xf32>
    %46 = vector.extract_strided_slice %36 {offsets = [0, 0], sizes = [8, 32], strides = [1, 1]} : vector<8x96xf32> to vector<8x32xf32>
    %47 = arith.mulf %46, %30 : vector<8x32xf32>
    %48 = arith.addf %45, %47 : vector<8x32xf32>
    %49 = tpu.concatenate %42, %48 in 1 : vector<8x32xf32>, vector<8x32xf32> -> vector<8x64xf32>
    %50 = vector.extract_strided_slice %28 {offsets = [0, 64], sizes = [8, 32], strides = [1, 1]} : vector<8x96xf32> to vector<8x32xf32>
    %51 = vector.extract_strided_slice %36 {offsets = [0, 64], sizes = [8, 32], strides = [1, 1]} : vector<8x96xf32> to vector<8x32xf32>
    %52 = tpu.concatenate %50, %51 in 1 : vector<8x32xf32>, vector<8x32xf32> -> vector<8x64xf32>
    %53 = math.tanh %49 : vector<8x64xf32>
    %54 = arith.mulf %52, %53 : vector<8x64xf32>
    %c1_i32 = arith.constant 1 : i32
    %c8_i32_15 = arith.constant 8 : i32
    %55 = arith.muli %c1_i32, %c8_i32_15 : i32
    %56 = tpu.assume_multiple %55, 8 : i32
    %c7_i32_16 = arith.constant 7 : i32
    %57 = arith.subi %c7_i32_16, %c1_i32 : i32
    %c8_i32_17 = arith.constant 8 : i32
    %58 = arith.muli %57, %c8_i32_17 : i32
    %59 = tpu.assume_multiple %58, 8 : i32
    %60 = arith.index_cast %56 : i32 to index
    %c0_18 = arith.constant 0 : index
    %61 = vector.load %arg5[%60, %c0_18] : memref<64x256xf32, #tpu.memory_space<vmem>>, vector<8x128xf32>
    %62 = arith.index_cast %59 : i32 to index
    %c128_19 = arith.constant 128 : index
    %63 = vector.load %arg5[%62, %c128_19] : memref<64x256xf32, #tpu.memory_space<vmem>>, vector<8x128xf32>
    %64 = tpu.concatenate %61, %63 in 1 : vector<8x128xf32>, vector<8x128xf32> -> vector<8x256xf32>
    %cst_20 = arith.constant dense<0.000000e+00> : vector<8x256xf32>
    %65 = tpu.matmul %54, %2, %cst_20 {dimension_numbers = #tpu.dot_dimension_numbers<[1], [0], [0], [1], [0, 0, 1, 1], [], []>} : vector<8x64xf32>, vector<64x256xf32>, vector<8x256xf32> -> vector<8x256xf32>
    %66 = arith.addf %64, %65 : vector<8x256xf32>
    %67 = vector.extract_strided_slice %66 {offsets = [0, 0], sizes = [8, 32], strides = [1, 1]} : vector<8x256xf32> to vector<8x32xf32>
    %68 = math.tanh %67 : vector<8x32xf32>
    %69 = vector.extract_strided_slice %66 {offsets = [0, 32], sizes = [8, 96], strides = [1, 1]} : vector<8x256xf32> to vector<8x96xf32>
    %70 = arith.negf %69 : vector<8x96xf32>
    %71 = math.exp %70 : vector<8x96xf32>
    %cst_21 = arith.constant 1.000000e+00 : f32
    %72 = vector.broadcast %cst_21 : f32 to vector<8x96xf32>
    %73 = arith.addf %72, %71 : vector<8x96xf32>
    %74 = arith.divf %72, %73 : vector<8x96xf32>
    %75 = vector.extract_strided_slice %66 {offsets = [0, 128], sizes = [8, 32], strides = [1, 1]} : vector<8x256xf32> to vector<8x32xf32>
    %76 = math.tanh %75 : vector<8x32xf32>
    %77 = vector.extract_strided_slice %66 {offsets = [0, 160], sizes = [8, 96], strides = [1, 1]} : vector<8x256xf32> to vector<8x96xf32>
    %78 = arith.negf %77 : vector<8x96xf32>
    %79 = math.exp %78 : vector<8x96xf32>
    %cst_22 = arith.constant 1.000000e+00 : f32
    %80 = vector.broadcast %cst_22 : f32 to vector<8x96xf32>
    %81 = arith.addf %80, %79 : vector<8x96xf32>
    %82 = arith.divf %80, %81 : vector<8x96xf32>
    %83 = vector.extract_strided_slice %74 {offsets = [0, 32], sizes = [8, 32], strides = [1, 1]} : vector<8x96xf32> to vector<8x32xf32>
    %84 = vector.extract_strided_slice %49 {offsets = [0, 0], sizes = [8, 32], strides = [1, 1]} : vector<8x64xf32> to vector<8x32xf32>
    %85 = arith.mulf %83, %84 : vector<8x32xf32>
    %86 = vector.extract_strided_slice %74 {offsets = [0, 0], sizes = [8, 32], strides = [1, 1]} : vector<8x96xf32> to vector<8x32xf32>
    %87 = arith.mulf %86, %68 : vector<8x32xf32>
    %88 = arith.addf %85, %87 : vector<8x32xf32>
    %89 = vector.extract_strided_slice %82 {offsets = [0, 32], sizes = [8, 32], strides = [1, 1]} : vector<8x96xf32> to vector<8x32xf32>
    %90 = vector.extract_strided_slice %49 {offsets = [0, 32], sizes = [8, 32], strides = [1, 1]} : vector<8x64xf32> to vector<8x32xf32>
    %91 = arith.mulf %89, %90 : vector<8x32xf32>
    %92 = vector.extract_strided_slice %82 {offsets = [0, 0], sizes = [8, 32], strides = [1, 1]} : vector<8x96xf32> to vector<8x32xf32>
    %93 = arith.mulf %92, %76 : vector<8x32xf32>
    %94 = arith.addf %91, %93 : vector<8x32xf32>
    %95 = tpu.concatenate %88, %94 in 1 : vector<8x32xf32>, vector<8x32xf32> -> vector<8x64xf32>
    %96 = vector.extract_strided_slice %74 {offsets = [0, 64], sizes = [8, 32], strides = [1, 1]} : vector<8x96xf32> to vector<8x32xf32>
    %97 = vector.extract_strided_slice %82 {offsets = [0, 64], sizes = [8, 32], strides = [1, 1]} : vector<8x96xf32> to vector<8x32xf32>
    %98 = tpu.concatenate %96, %97 in 1 : vector<8x32xf32>, vector<8x32xf32> -> vector<8x64xf32>
    %99 = math.tanh %95 : vector<8x64xf32>
    %100 = arith.mulf %98, %99 : vector<8x64xf32>
    %c2_i32 = arith.constant 2 : i32
    %c8_i32_23 = arith.constant 8 : i32
    %101 = arith.muli %c2_i32, %c8_i32_23 : i32
    %102 = tpu.assume_multiple %101, 8 : i32
    %c7_i32_24 = arith.constant 7 : i32
    %103 = arith.subi %c7_i32_24, %c2_i32 : i32
    %c8_i32_25 = arith.constant 8 : i32
    %104 = arith.muli %103, %c8_i32_25 : i32
    %105 = tpu.assume_multiple %104, 8 : i32
    %106 = arith.index_cast %102 : i32 to index
    %c0_26 = arith.constant 0 : index
    %107 = vector.load %arg5[%106, %c0_26] : memref<64x256xf32, #tpu.memory_space<vmem>>, vector<8x128xf32>
    %108 = arith.index_cast %105 : i32 to index
    %c128_27 = arith.constant 128 : index
    %109 = vector.load %arg5[%108, %c128_27] : memref<64x256xf32, #tpu.memory_space<vmem>>, vector<8x128xf32>
    %110 = tpu.concatenate %107, %109 in 1 : vector<8x128xf32>, vector<8x128xf32> -> vector<8x256xf32>
    %cst_28 = arith.constant dense<0.000000e+00> : vector<8x256xf32>
    %111 = tpu.matmul %100, %2, %cst_28 {dimension_numbers = #tpu.dot_dimension_numbers<[1], [0], [0], [1], [0, 0, 1, 1], [], []>} : vector<8x64xf32>, vector<64x256xf32>, vector<8x256xf32> -> vector<8x256xf32>
    %112 = arith.addf %110, %111 : vector<8x256xf32>
    %113 = vector.extract_strided_slice %112 {offsets = [0, 0], sizes = [8, 32], strides = [1, 1]} : vector<8x256xf32> to vector<8x32xf32>
    %114 = math.tanh %113 : vector<8x32xf32>
    %115 = vector.extract_strided_slice %112 {offsets = [0, 32], sizes = [8, 96], strides = [1, 1]} : vector<8x256xf32> to vector<8x96xf32>
    %116 = arith.negf %115 : vector<8x96xf32>
    %117 = math.exp %116 : vector<8x96xf32>
    %cst_29 = arith.constant 1.000000e+00 : f32
    %118 = vector.broadcast %cst_29 : f32 to vector<8x96xf32>
    %119 = arith.addf %118, %117 : vector<8x96xf32>
    %120 = arith.divf %118, %119 : vector<8x96xf32>
    %121 = vector.extract_strided_slice %112 {offsets = [0, 128], sizes = [8, 32], strides = [1, 1]} : vector<8x256xf32> to vector<8x32xf32>
    %122 = math.tanh %121 : vector<8x32xf32>
    %123 = vector.extract_strided_slice %112 {offsets = [0, 160], sizes = [8, 96], strides = [1, 1]} : vector<8x256xf32> to vector<8x96xf32>
    %124 = arith.negf %123 : vector<8x96xf32>
    %125 = math.exp %124 : vector<8x96xf32>
    %cst_30 = arith.constant 1.000000e+00 : f32
    %126 = vector.broadcast %cst_30 : f32 to vector<8x96xf32>
    %127 = arith.addf %126, %125 : vector<8x96xf32>
    %128 = arith.divf %126, %127 : vector<8x96xf32>
    %129 = vector.extract_strided_slice %120 {offsets = [0, 32], sizes = [8, 32], strides = [1, 1]} : vector<8x96xf32> to vector<8x32xf32>
    %130 = vector.extract_strided_slice %95 {offsets = [0, 0], sizes = [8, 32], strides = [1, 1]} : vector<8x64xf32> to vector<8x32xf32>
    %131 = arith.mulf %129, %130 : vector<8x32xf32>
    %132 = vector.extract_strided_slice %120 {offsets = [0, 0], sizes = [8, 32], strides = [1, 1]} : vector<8x96xf32> to vector<8x32xf32>
    %133 = arith.mulf %132, %114 : vector<8x32xf32>
    %134 = arith.addf %131, %133 : vector<8x32xf32>
    %135 = vector.extract_strided_slice %128 {offsets = [0, 32], sizes = [8, 32], strides = [1, 1]} : vector<8x96xf32> to vector<8x32xf32>
    %136 = vector.extract_strided_slice %95 {offsets = [0, 32], sizes = [8, 32], strides = [1, 1]} : vector<8x64xf32> to vector<8x32xf32>
    %137 = arith.mulf %135, %136 : vector<8x32xf32>
    %138 = vector.extract_strided_slice %128 {offsets = [0, 0], sizes = [8, 32], strides = [1, 1]} : vector<8x96xf32> to vector<8x32xf32>
    %139 = arith.mulf %138, %122 : vector<8x32xf32>
    %140 = arith.addf %137, %139 : vector<8x32xf32>
    %141 = tpu.concatenate %134, %140 in 1 : vector<8x32xf32>, vector<8x32xf32> -> vector<8x64xf32>
    %142 = vector.extract_strided_slice %120 {offsets = [0, 64], sizes = [8, 32], strides = [1, 1]} : vector<8x96xf32> to vector<8x32xf32>
    %143 = vector.extract_strided_slice %128 {offsets = [0, 64], sizes = [8, 32], strides = [1, 1]} : vector<8x96xf32> to vector<8x32xf32>
    %144 = tpu.concatenate %142, %143 in 1 : vector<8x32xf32>, vector<8x32xf32> -> vector<8x64xf32>
    %145 = math.tanh %141 : vector<8x64xf32>
    %146 = arith.mulf %144, %145 : vector<8x64xf32>
    %c3_i32 = arith.constant 3 : i32
    %c8_i32_31 = arith.constant 8 : i32
    %147 = arith.muli %c3_i32, %c8_i32_31 : i32
    %148 = tpu.assume_multiple %147, 8 : i32
    %c7_i32_32 = arith.constant 7 : i32
    %149 = arith.subi %c7_i32_32, %c3_i32 : i32
    %c8_i32_33 = arith.constant 8 : i32
    %150 = arith.muli %149, %c8_i32_33 : i32
    %151 = tpu.assume_multiple %150, 8 : i32
    %152 = arith.index_cast %148 : i32 to index
    %c0_34 = arith.constant 0 : index
    %153 = vector.load %arg5[%152, %c0_34] : memref<64x256xf32, #tpu.memory_space<vmem>>, vector<8x128xf32>
    %154 = arith.index_cast %151 : i32 to index
    %c128_35 = arith.constant 128 : index
    %155 = vector.load %arg5[%154, %c128_35] : memref<64x256xf32, #tpu.memory_space<vmem>>, vector<8x128xf32>
    %156 = tpu.concatenate %153, %155 in 1 : vector<8x128xf32>, vector<8x128xf32> -> vector<8x256xf32>
    %cst_36 = arith.constant dense<0.000000e+00> : vector<8x256xf32>
    %157 = tpu.matmul %146, %2, %cst_36 {dimension_numbers = #tpu.dot_dimension_numbers<[1], [0], [0], [1], [0, 0, 1, 1], [], []>} : vector<8x64xf32>, vector<64x256xf32>, vector<8x256xf32> -> vector<8x256xf32>
    %158 = arith.addf %156, %157 : vector<8x256xf32>
    %159 = vector.extract_strided_slice %158 {offsets = [0, 0], sizes = [8, 32], strides = [1, 1]} : vector<8x256xf32> to vector<8x32xf32>
    %160 = math.tanh %159 : vector<8x32xf32>
    %161 = vector.extract_strided_slice %158 {offsets = [0, 32], sizes = [8, 96], strides = [1, 1]} : vector<8x256xf32> to vector<8x96xf32>
    %162 = arith.negf %161 : vector<8x96xf32>
    %163 = math.exp %162 : vector<8x96xf32>
    %cst_37 = arith.constant 1.000000e+00 : f32
    %164 = vector.broadcast %cst_37 : f32 to vector<8x96xf32>
    %165 = arith.addf %164, %163 : vector<8x96xf32>
    %166 = arith.divf %164, %165 : vector<8x96xf32>
    %167 = vector.extract_strided_slice %158 {offsets = [0, 128], sizes = [8, 32], strides = [1, 1]} : vector<8x256xf32> to vector<8x32xf32>
    %168 = math.tanh %167 : vector<8x32xf32>
    %169 = vector.extract_strided_slice %158 {offsets = [0, 160], sizes = [8, 96], strides = [1, 1]} : vector<8x256xf32> to vector<8x96xf32>
    %170 = arith.negf %169 : vector<8x96xf32>
    %171 = math.exp %170 : vector<8x96xf32>
    %cst_38 = arith.constant 1.000000e+00 : f32
    %172 = vector.broadcast %cst_38 : f32 to vector<8x96xf32>
    %173 = arith.addf %172, %171 : vector<8x96xf32>
    %174 = arith.divf %172, %173 : vector<8x96xf32>
    %175 = vector.extract_strided_slice %166 {offsets = [0, 32], sizes = [8, 32], strides = [1, 1]} : vector<8x96xf32> to vector<8x32xf32>
    %176 = vector.extract_strided_slice %141 {offsets = [0, 0], sizes = [8, 32], strides = [1, 1]} : vector<8x64xf32> to vector<8x32xf32>
    %177 = arith.mulf %175, %176 : vector<8x32xf32>
    %178 = vector.extract_strided_slice %166 {offsets = [0, 0], sizes = [8, 32], strides = [1, 1]} : vector<8x96xf32> to vector<8x32xf32>
    %179 = arith.mulf %178, %160 : vector<8x32xf32>
    %180 = arith.addf %177, %179 : vector<8x32xf32>
    %181 = vector.extract_strided_slice %174 {offsets = [0, 32], sizes = [8, 32], strides = [1, 1]} : vector<8x96xf32> to vector<8x32xf32>
    %182 = vector.extract_strided_slice %141 {offsets = [0, 32], sizes = [8, 32], strides = [1, 1]} : vector<8x64xf32> to vector<8x32xf32>
    %183 = arith.mulf %181, %182 : vector<8x32xf32>
    %184 = vector.extract_strided_slice %174 {offsets = [0, 0], sizes = [8, 32], strides = [1, 1]} : vector<8x96xf32> to vector<8x32xf32>
    %185 = arith.mulf %184, %168 : vector<8x32xf32>
    %186 = arith.addf %183, %185 : vector<8x32xf32>
    %187 = tpu.concatenate %180, %186 in 1 : vector<8x32xf32>, vector<8x32xf32> -> vector<8x64xf32>
    %188 = vector.extract_strided_slice %166 {offsets = [0, 64], sizes = [8, 32], strides = [1, 1]} : vector<8x96xf32> to vector<8x32xf32>
    %189 = vector.extract_strided_slice %174 {offsets = [0, 64], sizes = [8, 32], strides = [1, 1]} : vector<8x96xf32> to vector<8x32xf32>
    %190 = tpu.concatenate %188, %189 in 1 : vector<8x32xf32>, vector<8x32xf32> -> vector<8x64xf32>
    %191 = math.tanh %187 : vector<8x64xf32>
    %192 = arith.mulf %190, %191 : vector<8x64xf32>
    %c4_i32 = arith.constant 4 : i32
    %c8_i32_39 = arith.constant 8 : i32
    %193 = arith.muli %c4_i32, %c8_i32_39 : i32
    %194 = tpu.assume_multiple %193, 8 : i32
    %c7_i32_40 = arith.constant 7 : i32
    %195 = arith.subi %c7_i32_40, %c4_i32 : i32
    %c8_i32_41 = arith.constant 8 : i32
    %196 = arith.muli %195, %c8_i32_41 : i32
    %197 = tpu.assume_multiple %196, 8 : i32
    %198 = arith.index_cast %194 : i32 to index
    %c0_42 = arith.constant 0 : index
    %199 = vector.load %arg5[%198, %c0_42] : memref<64x256xf32, #tpu.memory_space<vmem>>, vector<8x128xf32>
    %200 = arith.index_cast %197 : i32 to index
    %c128_43 = arith.constant 128 : index
    %201 = vector.load %arg5[%200, %c128_43] : memref<64x256xf32, #tpu.memory_space<vmem>>, vector<8x128xf32>
    %202 = tpu.concatenate %199, %201 in 1 : vector<8x128xf32>, vector<8x128xf32> -> vector<8x256xf32>
    %cst_44 = arith.constant dense<0.000000e+00> : vector<8x256xf32>
    %203 = tpu.matmul %192, %2, %cst_44 {dimension_numbers = #tpu.dot_dimension_numbers<[1], [0], [0], [1], [0, 0, 1, 1], [], []>} : vector<8x64xf32>, vector<64x256xf32>, vector<8x256xf32> -> vector<8x256xf32>
    %204 = arith.addf %202, %203 : vector<8x256xf32>
    %205 = vector.extract_strided_slice %204 {offsets = [0, 0], sizes = [8, 32], strides = [1, 1]} : vector<8x256xf32> to vector<8x32xf32>
    %206 = math.tanh %205 : vector<8x32xf32>
    %207 = vector.extract_strided_slice %204 {offsets = [0, 32], sizes = [8, 96], strides = [1, 1]} : vector<8x256xf32> to vector<8x96xf32>
    %208 = arith.negf %207 : vector<8x96xf32>
    %209 = math.exp %208 : vector<8x96xf32>
    %cst_45 = arith.constant 1.000000e+00 : f32
    %210 = vector.broadcast %cst_45 : f32 to vector<8x96xf32>
    %211 = arith.addf %210, %209 : vector<8x96xf32>
    %212 = arith.divf %210, %211 : vector<8x96xf32>
    %213 = vector.extract_strided_slice %204 {offsets = [0, 128], sizes = [8, 32], strides = [1, 1]} : vector<8x256xf32> to vector<8x32xf32>
    %214 = math.tanh %213 : vector<8x32xf32>
    %215 = vector.extract_strided_slice %204 {offsets = [0, 160], sizes = [8, 96], strides = [1, 1]} : vector<8x256xf32> to vector<8x96xf32>
    %216 = arith.negf %215 : vector<8x96xf32>
    %217 = math.exp %216 : vector<8x96xf32>
    %cst_46 = arith.constant 1.000000e+00 : f32
    %218 = vector.broadcast %cst_46 : f32 to vector<8x96xf32>
    %219 = arith.addf %218, %217 : vector<8x96xf32>
    %220 = arith.divf %218, %219 : vector<8x96xf32>
    %221 = vector.extract_strided_slice %212 {offsets = [0, 32], sizes = [8, 32], strides = [1, 1]} : vector<8x96xf32> to vector<8x32xf32>
    %222 = vector.extract_strided_slice %187 {offsets = [0, 0], sizes = [8, 32], strides = [1, 1]} : vector<8x64xf32> to vector<8x32xf32>
    %223 = arith.mulf %221, %222 : vector<8x32xf32>
    %224 = vector.extract_strided_slice %212 {offsets = [0, 0], sizes = [8, 32], strides = [1, 1]} : vector<8x96xf32> to vector<8x32xf32>
    %225 = arith.mulf %224, %206 : vector<8x32xf32>
    %226 = arith.addf %223, %225 : vector<8x32xf32>
    %227 = vector.extract_strided_slice %220 {offsets = [0, 32], sizes = [8, 32], strides = [1, 1]} : vector<8x96xf32> to vector<8x32xf32>
    %228 = vector.extract_strided_slice %187 {offsets = [0, 32], sizes = [8, 32], strides = [1, 1]} : vector<8x64xf32> to vector<8x32xf32>
    %229 = arith.mulf %227, %228 : vector<8x32xf32>
    %230 = vector.extract_strided_slice %220 {offsets = [0, 0], sizes = [8, 32], strides = [1, 1]} : vector<8x96xf32> to vector<8x32xf32>
    %231 = arith.mulf %230, %214 : vector<8x32xf32>
    %232 = arith.addf %229, %231 : vector<8x32xf32>
    %233 = tpu.concatenate %226, %232 in 1 : vector<8x32xf32>, vector<8x32xf32> -> vector<8x64xf32>
    %234 = vector.extract_strided_slice %212 {offsets = [0, 64], sizes = [8, 32], strides = [1, 1]} : vector<8x96xf32> to vector<8x32xf32>
    %235 = vector.extract_strided_slice %220 {offsets = [0, 64], sizes = [8, 32], strides = [1, 1]} : vector<8x96xf32> to vector<8x32xf32>
    %236 = tpu.concatenate %234, %235 in 1 : vector<8x32xf32>, vector<8x32xf32> -> vector<8x64xf32>
    %237 = math.tanh %233 : vector<8x64xf32>
    %238 = arith.mulf %236, %237 : vector<8x64xf32>
    %c5_i32 = arith.constant 5 : i32
    %c8_i32_47 = arith.constant 8 : i32
    %239 = arith.muli %c5_i32, %c8_i32_47 : i32
    %240 = tpu.assume_multiple %239, 8 : i32
    %c7_i32_48 = arith.constant 7 : i32
    %241 = arith.subi %c7_i32_48, %c5_i32 : i32
    %c8_i32_49 = arith.constant 8 : i32
    %242 = arith.muli %241, %c8_i32_49 : i32
    %243 = tpu.assume_multiple %242, 8 : i32
    %244 = arith.index_cast %240 : i32 to index
    %c0_50 = arith.constant 0 : index
    %245 = vector.load %arg5[%244, %c0_50] : memref<64x256xf32, #tpu.memory_space<vmem>>, vector<8x128xf32>
    %246 = arith.index_cast %243 : i32 to index
    %c128_51 = arith.constant 128 : index
    %247 = vector.load %arg5[%246, %c128_51] : memref<64x256xf32, #tpu.memory_space<vmem>>, vector<8x128xf32>
    %248 = tpu.concatenate %245, %247 in 1 : vector<8x128xf32>, vector<8x128xf32> -> vector<8x256xf32>
    %cst_52 = arith.constant dense<0.000000e+00> : vector<8x256xf32>
    %249 = tpu.matmul %238, %2, %cst_52 {dimension_numbers = #tpu.dot_dimension_numbers<[1], [0], [0], [1], [0, 0, 1, 1], [], []>} : vector<8x64xf32>, vector<64x256xf32>, vector<8x256xf32> -> vector<8x256xf32>
    %250 = arith.addf %248, %249 : vector<8x256xf32>
    %251 = vector.extract_strided_slice %250 {offsets = [0, 0], sizes = [8, 32], strides = [1, 1]} : vector<8x256xf32> to vector<8x32xf32>
    %252 = math.tanh %251 : vector<8x32xf32>
    %253 = vector.extract_strided_slice %250 {offsets = [0, 32], sizes = [8, 96], strides = [1, 1]} : vector<8x256xf32> to vector<8x96xf32>
    %254 = arith.negf %253 : vector<8x96xf32>
    %255 = math.exp %254 : vector<8x96xf32>
    %cst_53 = arith.constant 1.000000e+00 : f32
    %256 = vector.broadcast %cst_53 : f32 to vector<8x96xf32>
    %257 = arith.addf %256, %255 : vector<8x96xf32>
    %258 = arith.divf %256, %257 : vector<8x96xf32>
    %259 = vector.extract_strided_slice %250 {offsets = [0, 128], sizes = [8, 32], strides = [1, 1]} : vector<8x256xf32> to vector<8x32xf32>
    %260 = math.tanh %259 : vector<8x32xf32>
    %261 = vector.extract_strided_slice %250 {offsets = [0, 160], sizes = [8, 96], strides = [1, 1]} : vector<8x256xf32> to vector<8x96xf32>
    %262 = arith.negf %261 : vector<8x96xf32>
    %263 = math.exp %262 : vector<8x96xf32>
    %cst_54 = arith.constant 1.000000e+00 : f32
    %264 = vector.broadcast %cst_54 : f32 to vector<8x96xf32>
    %265 = arith.addf %264, %263 : vector<8x96xf32>
    %266 = arith.divf %264, %265 : vector<8x96xf32>
    %267 = vector.extract_strided_slice %258 {offsets = [0, 32], sizes = [8, 32], strides = [1, 1]} : vector<8x96xf32> to vector<8x32xf32>
    %268 = vector.extract_strided_slice %233 {offsets = [0, 0], sizes = [8, 32], strides = [1, 1]} : vector<8x64xf32> to vector<8x32xf32>
    %269 = arith.mulf %267, %268 : vector<8x32xf32>
    %270 = vector.extract_strided_slice %258 {offsets = [0, 0], sizes = [8, 32], strides = [1, 1]} : vector<8x96xf32> to vector<8x32xf32>
    %271 = arith.mulf %270, %252 : vector<8x32xf32>
    %272 = arith.addf %269, %271 : vector<8x32xf32>
    %273 = vector.extract_strided_slice %266 {offsets = [0, 32], sizes = [8, 32], strides = [1, 1]} : vector<8x96xf32> to vector<8x32xf32>
    %274 = vector.extract_strided_slice %233 {offsets = [0, 32], sizes = [8, 32], strides = [1, 1]} : vector<8x64xf32> to vector<8x32xf32>
    %275 = arith.mulf %273, %274 : vector<8x32xf32>
    %276 = vector.extract_strided_slice %266 {offsets = [0, 0], sizes = [8, 32], strides = [1, 1]} : vector<8x96xf32> to vector<8x32xf32>
    %277 = arith.mulf %276, %260 : vector<8x32xf32>
    %278 = arith.addf %275, %277 : vector<8x32xf32>
    %279 = tpu.concatenate %272, %278 in 1 : vector<8x32xf32>, vector<8x32xf32> -> vector<8x64xf32>
    %280 = vector.extract_strided_slice %258 {offsets = [0, 64], sizes = [8, 32], strides = [1, 1]} : vector<8x96xf32> to vector<8x32xf32>
    %281 = vector.extract_strided_slice %266 {offsets = [0, 64], sizes = [8, 32], strides = [1, 1]} : vector<8x96xf32> to vector<8x32xf32>
    %282 = tpu.concatenate %280, %281 in 1 : vector<8x32xf32>, vector<8x32xf32> -> vector<8x64xf32>
    %283 = math.tanh %279 : vector<8x64xf32>
    %284 = arith.mulf %282, %283 : vector<8x64xf32>
    %c6_i32 = arith.constant 6 : i32
    %c8_i32_55 = arith.constant 8 : i32
    %285 = arith.muli %c6_i32, %c8_i32_55 : i32
    %286 = tpu.assume_multiple %285, 8 : i32
    %c7_i32_56 = arith.constant 7 : i32
    %287 = arith.subi %c7_i32_56, %c6_i32 : i32
    %c8_i32_57 = arith.constant 8 : i32
    %288 = arith.muli %287, %c8_i32_57 : i32
    %289 = tpu.assume_multiple %288, 8 : i32
    %290 = arith.index_cast %286 : i32 to index
    %c0_58 = arith.constant 0 : index
    %291 = vector.load %arg5[%290, %c0_58] : memref<64x256xf32, #tpu.memory_space<vmem>>, vector<8x128xf32>
    %292 = arith.index_cast %289 : i32 to index
    %c128_59 = arith.constant 128 : index
    %293 = vector.load %arg5[%292, %c128_59] : memref<64x256xf32, #tpu.memory_space<vmem>>, vector<8x128xf32>
    %294 = tpu.concatenate %291, %293 in 1 : vector<8x128xf32>, vector<8x128xf32> -> vector<8x256xf32>
    %cst_60 = arith.constant dense<0.000000e+00> : vector<8x256xf32>
    %295 = tpu.matmul %284, %2, %cst_60 {dimension_numbers = #tpu.dot_dimension_numbers<[1], [0], [0], [1], [0, 0, 1, 1], [], []>} : vector<8x64xf32>, vector<64x256xf32>, vector<8x256xf32> -> vector<8x256xf32>
    %296 = arith.addf %294, %295 : vector<8x256xf32>
    %297 = vector.extract_strided_slice %296 {offsets = [0, 0], sizes = [8, 32], strides = [1, 1]} : vector<8x256xf32> to vector<8x32xf32>
    %298 = math.tanh %297 : vector<8x32xf32>
    %299 = vector.extract_strided_slice %296 {offsets = [0, 32], sizes = [8, 96], strides = [1, 1]} : vector<8x256xf32> to vector<8x96xf32>
    %300 = arith.negf %299 : vector<8x96xf32>
    %301 = math.exp %300 : vector<8x96xf32>
    %cst_61 = arith.constant 1.000000e+00 : f32
    %302 = vector.broadcast %cst_61 : f32 to vector<8x96xf32>
    %303 = arith.addf %302, %301 : vector<8x96xf32>
    %304 = arith.divf %302, %303 : vector<8x96xf32>
    %305 = vector.extract_strided_slice %296 {offsets = [0, 128], sizes = [8, 32], strides = [1, 1]} : vector<8x256xf32> to vector<8x32xf32>
    %306 = math.tanh %305 : vector<8x32xf32>
    %307 = vector.extract_strided_slice %296 {offsets = [0, 160], sizes = [8, 96], strides = [1, 1]} : vector<8x256xf32> to vector<8x96xf32>
    %308 = arith.negf %307 : vector<8x96xf32>
    %309 = math.exp %308 : vector<8x96xf32>
    %cst_62 = arith.constant 1.000000e+00 : f32
    %310 = vector.broadcast %cst_62 : f32 to vector<8x96xf32>
    %311 = arith.addf %310, %309 : vector<8x96xf32>
    %312 = arith.divf %310, %311 : vector<8x96xf32>
    %313 = vector.extract_strided_slice %304 {offsets = [0, 32], sizes = [8, 32], strides = [1, 1]} : vector<8x96xf32> to vector<8x32xf32>
    %314 = vector.extract_strided_slice %279 {offsets = [0, 0], sizes = [8, 32], strides = [1, 1]} : vector<8x64xf32> to vector<8x32xf32>
    %315 = arith.mulf %313, %314 : vector<8x32xf32>
    %316 = vector.extract_strided_slice %304 {offsets = [0, 0], sizes = [8, 32], strides = [1, 1]} : vector<8x96xf32> to vector<8x32xf32>
    %317 = arith.mulf %316, %298 : vector<8x32xf32>
    %318 = arith.addf %315, %317 : vector<8x32xf32>
    %319 = vector.extract_strided_slice %312 {offsets = [0, 32], sizes = [8, 32], strides = [1, 1]} : vector<8x96xf32> to vector<8x32xf32>
    %320 = vector.extract_strided_slice %279 {offsets = [0, 32], sizes = [8, 32], strides = [1, 1]} : vector<8x64xf32> to vector<8x32xf32>
    %321 = arith.mulf %319, %320 : vector<8x32xf32>
    %322 = vector.extract_strided_slice %312 {offsets = [0, 0], sizes = [8, 32], strides = [1, 1]} : vector<8x96xf32> to vector<8x32xf32>
    %323 = arith.mulf %322, %306 : vector<8x32xf32>
    %324 = arith.addf %321, %323 : vector<8x32xf32>
    %325 = tpu.concatenate %318, %324 in 1 : vector<8x32xf32>, vector<8x32xf32> -> vector<8x64xf32>
    %326 = vector.extract_strided_slice %304 {offsets = [0, 64], sizes = [8, 32], strides = [1, 1]} : vector<8x96xf32> to vector<8x32xf32>
    %327 = vector.extract_strided_slice %312 {offsets = [0, 64], sizes = [8, 32], strides = [1, 1]} : vector<8x96xf32> to vector<8x32xf32>
    %328 = tpu.concatenate %326, %327 in 1 : vector<8x32xf32>, vector<8x32xf32> -> vector<8x64xf32>
    %329 = math.tanh %325 : vector<8x64xf32>
    %330 = arith.mulf %328, %329 : vector<8x64xf32>
    %c7_i32_63 = arith.constant 7 : i32
    %c8_i32_64 = arith.constant 8 : i32
    %331 = arith.muli %c7_i32_63, %c8_i32_64 : i32
    %332 = tpu.assume_multiple %331, 8 : i32
    %c7_i32_65 = arith.constant 7 : i32
    %333 = arith.subi %c7_i32_65, %c7_i32_63 : i32
    %c8_i32_66 = arith.constant 8 : i32
    %334 = arith.muli %333, %c8_i32_66 : i32
    %335 = tpu.assume_multiple %334, 8 : i32
    %336 = arith.index_cast %332 : i32 to index
    %c0_67 = arith.constant 0 : index
    %337 = vector.load %arg5[%336, %c0_67] : memref<64x256xf32, #tpu.memory_space<vmem>>, vector<8x128xf32>
    %338 = arith.index_cast %335 : i32 to index
    %c128_68 = arith.constant 128 : index
    %339 = vector.load %arg5[%338, %c128_68] : memref<64x256xf32, #tpu.memory_space<vmem>>, vector<8x128xf32>
    %340 = tpu.concatenate %337, %339 in 1 : vector<8x128xf32>, vector<8x128xf32> -> vector<8x256xf32>
    %cst_69 = arith.constant dense<0.000000e+00> : vector<8x256xf32>
    %341 = tpu.matmul %330, %2, %cst_69 {dimension_numbers = #tpu.dot_dimension_numbers<[1], [0], [0], [1], [0, 0, 1, 1], [], []>} : vector<8x64xf32>, vector<64x256xf32>, vector<8x256xf32> -> vector<8x256xf32>
    %342 = arith.addf %340, %341 : vector<8x256xf32>
    %343 = vector.extract_strided_slice %342 {offsets = [0, 0], sizes = [8, 32], strides = [1, 1]} : vector<8x256xf32> to vector<8x32xf32>
    %344 = math.tanh %343 : vector<8x32xf32>
    %345 = vector.extract_strided_slice %342 {offsets = [0, 32], sizes = [8, 96], strides = [1, 1]} : vector<8x256xf32> to vector<8x96xf32>
    %346 = arith.negf %345 : vector<8x96xf32>
    %347 = math.exp %346 : vector<8x96xf32>
    %cst_70 = arith.constant 1.000000e+00 : f32
    %348 = vector.broadcast %cst_70 : f32 to vector<8x96xf32>
    %349 = arith.addf %348, %347 : vector<8x96xf32>
    %350 = arith.divf %348, %349 : vector<8x96xf32>
    %351 = vector.extract_strided_slice %342 {offsets = [0, 128], sizes = [8, 32], strides = [1, 1]} : vector<8x256xf32> to vector<8x32xf32>
    %352 = math.tanh %351 : vector<8x32xf32>
    %353 = vector.extract_strided_slice %342 {offsets = [0, 160], sizes = [8, 96], strides = [1, 1]} : vector<8x256xf32> to vector<8x96xf32>
    %354 = arith.negf %353 : vector<8x96xf32>
    %355 = math.exp %354 : vector<8x96xf32>
    %cst_71 = arith.constant 1.000000e+00 : f32
    %356 = vector.broadcast %cst_71 : f32 to vector<8x96xf32>
    %357 = arith.addf %356, %355 : vector<8x96xf32>
    %358 = arith.divf %356, %357 : vector<8x96xf32>
    %359 = vector.extract_strided_slice %350 {offsets = [0, 32], sizes = [8, 32], strides = [1, 1]} : vector<8x96xf32> to vector<8x32xf32>
    %360 = vector.extract_strided_slice %325 {offsets = [0, 0], sizes = [8, 32], strides = [1, 1]} : vector<8x64xf32> to vector<8x32xf32>
    %361 = arith.mulf %359, %360 : vector<8x32xf32>
    %362 = vector.extract_strided_slice %350 {offsets = [0, 0], sizes = [8, 32], strides = [1, 1]} : vector<8x96xf32> to vector<8x32xf32>
    %363 = arith.mulf %362, %344 : vector<8x32xf32>
    %364 = arith.addf %361, %363 : vector<8x32xf32>
    %365 = vector.extract_strided_slice %358 {offsets = [0, 32], sizes = [8, 32], strides = [1, 1]} : vector<8x96xf32> to vector<8x32xf32>
    %366 = vector.extract_strided_slice %325 {offsets = [0, 32], sizes = [8, 32], strides = [1, 1]} : vector<8x64xf32> to vector<8x32xf32>
    %367 = arith.mulf %365, %366 : vector<8x32xf32>
    %368 = vector.extract_strided_slice %358 {offsets = [0, 0], sizes = [8, 32], strides = [1, 1]} : vector<8x96xf32> to vector<8x32xf32>
    %369 = arith.mulf %368, %352 : vector<8x32xf32>
    %370 = arith.addf %367, %369 : vector<8x32xf32>
    %371 = tpu.concatenate %364, %370 in 1 : vector<8x32xf32>, vector<8x32xf32> -> vector<8x64xf32>
    %372 = vector.extract_strided_slice %350 {offsets = [0, 64], sizes = [8, 32], strides = [1, 1]} : vector<8x96xf32> to vector<8x32xf32>
    %373 = vector.extract_strided_slice %358 {offsets = [0, 64], sizes = [8, 32], strides = [1, 1]} : vector<8x96xf32> to vector<8x32xf32>
    %374 = tpu.concatenate %372, %373 in 1 : vector<8x32xf32>, vector<8x32xf32> -> vector<8x64xf32>
    %375 = math.tanh %371 : vector<8x64xf32>
    %376 = arith.mulf %374, %375 : vector<8x64xf32>
    %c8_i32_72 = arith.constant 8 : i32
    %c0_73 = arith.constant 0 : index
    %c0_74 = arith.constant 0 : index
    %377 = vector.load %arg4[%c0_73, %c0_74] : memref<8x64xf32, #tpu.memory_space<vmem>>, vector<8x64xf32>
    tpu.vector_store %arg4[%c0_73, %c0_74], %376 {strides = array<i32>} : memref<8x64xf32, #tpu.memory_space<vmem>>, vector<8x64xf32>,
    return
  }
}

</mosaic_0001>

<llo_original>
// kernel: tpu_custom_call.1
$region0: #{tpu_custom_call.1}
  #allocation0 [shape = 'u32[]', space=smem, size = 0x4, offset = 0x4, fixed_abs, tag = 'smem constant byte address 0x4 - core index']
  #allocation1 [shape = 'u32[144,128]{1,0:T(1,128)}', space=vmem, size = 0x12000, scoped, tag = 'internal scratch']
  #allocation2 [shape = 'f32[64,256]{1,0:T(8,128)}', space=vmem, size = 0x10000, scoped, tag = 'scratch operand']
  %s0 = inlined_call_operand.vmem [shape: f32[64,32], index: 0, kind: input, shape index: {}]
  %s1 = inlined_call_operand.vmem [shape: f32[32,256], index: 1, kind: input, shape index: {}]
  %s2 = inlined_call_operand.vmem [shape: f32[1,256], index: 2, kind: input, shape index: {}]
  %s3 = inlined_call_operand.hbm [shape: f32[64,256], index: 3, kind: input, shape index: {}]
  %s4 = inlined_call_operand.hbm [shape: f32[8,64], index: 4, kind: output, shape index: {}]
  %s5 = sld [smem:[#allocation0]]
  $region30: #{tpu_custom_call.1} parent=0
    _
  %s7 = ssub.s32 1, %s5
  %s8 = scalar_select 0, %s7, %s5
  $region1: #{tpu_custom_call.1} parent=0
    #allocation3 [shape = 'u8[65536]{0}', space=vmem, size = 0x10000, scoped, tag = 'input window, operand 3, single buffered']
    #allocation4 [shape = 's32[1]{0}', space=sflag, size = 0x4, scoped, tag = 'scoped memory for tpu_custom_call.1']
    #allocation5 [shape = 's32[1]{0}', space=sflag, size = 0x4, scoped, tag = 'scoped memory for tpu_custom_call.1']
    #allocation6 [shape = 'u8[4096]{0}', space=vmem, size = 0x1000, scoped, tag = 'output window, operand 0, single buffered']
    %9 = vsyncpa [#allocation4], 0
    %10 = vsyncpa [#allocation5], 0
    // Predicated region
    $region2: #{tpu_custom_call.1} parent=1 // pred_check
      _
    $region3: #{tpu_custom_call.1} parent=1 // pred_check_branch
      %12 = sbr.rel (0) target = $region5
    $region4: #{tpu_custom_call.1} parent=1 // pred_region
      _
    $region5: #{tpu_custom_call.1} parent=1 // pred_fallthru
      _
    // Predicated region
    $region6: #{tpu_custom_call.1} parent=1 // pred_check
      _
    $region7: #{tpu_custom_call.1} parent=1 // pred_check_branch
      %14 = sbr.rel (0) target = $region9
    $region8: #{tpu_custom_call.1} parent=1 // pred_region
      _
    $region9: #{tpu_custom_call.1} parent=1 // pred_fallthru
      _
    // Predicated region
    $region10: #{tpu_custom_call.1} parent=1 // pred_check
      _
    $region11: #{tpu_custom_call.1} parent=1 // pred_check_branch
      %16 = sbr.rel (0) target = $region13
    $region12: #{tpu_custom_call.1} parent=1 // pred_region
      _
    $region13: #{tpu_custom_call.1} parent=1 // pred_fallthru
      _
    // Predicated region
    $region14: #{tpu_custom_call.1} parent=1 // pred_check
      _
    $region15: #{tpu_custom_call.1} parent=1 // pred_check_branch
      %18 = sbr.rel (0) target = $region17
    $region16: #{tpu_custom_call.1} parent=1 // pred_region
      %s20 = ssub.s32 2048, 2048
      %21 = vsyncadd [#allocation4], %s20
      %s22 = sshll.u32 [#allocation3], 4
      %s23 = int_to_ptr.vmem [resolvable:$true] %s22
      %28 = dma.hbm_to_vmem [thread:$0]  %s3, 2048, %s23, [#allocation4], 256, 256, 16
    $region17: #{tpu_custom_call.1} parent=1 // pred_fallthru
      _
    // Predicated region
    $region18: #{tpu_custom_call.1} parent=1 // pred_check
      _
    $region19: #{tpu_custom_call.1} parent=1 // pred_check_branch
      %30 = sbr.rel (0) target = $region21
    $region20: #{tpu_custom_call.1} parent=1 // pred_region
      %31 = dma.done [#allocation4], 2048
    $region21: #{tpu_custom_call.1} parent=1 // pred_fallthru
      _
    %v32 = vld [vmem:[%s1] sm:$0xff]
    %v33 = vld [vmem:[%s1 + $0x8] sm:$0xff]
    %v34 = vld [vmem:[%s1 + $0x10] sm:$0xff]
    %v35 = vld [vmem:[%s1 + $0x18] sm:$0xff]
    %v36 = vld [vmem:[%s1 + $0x20] sm:$0xff]
    %v37 = vld [vmem:[%s1 + $0x28] sm:$0xff]
    %v38 = vld [vmem:[%s1 + $0x30] sm:$0xff]
    %v39 = vld [vmem:[%s1 + $0x38] sm:$0xff]
    %v40 = vld [vmem:[%s2] sm:$0x3]
    %v41 = vld [vmem:[#allocation3] sm:$0xff]
    %v42 = vld [vmem:[#allocation3 + $0x8] sm:$0xff]
    %v43 = vld [vmem:[#allocation3 + $0x10] sm:$0xff]
    %v44 = vld [vmem:[#allocation3 + $0x18] sm:$0xff]
    %v45 = vld [vmem:[#allocation3 + $0x20] sm:$0xff]
    %v46 = vld [vmem:[#allocation3 + $0x28] sm:$0xff]
    %v47 = vld [vmem:[#allocation3 + $0x30] sm:$0xff]
    %v48 = vld [vmem:[#allocation3 + $0x38] sm:$0xff]
    %v49 = vld [vmem:[#allocation3 + $0x40] sm:$0xff]
    %v50 = vld [vmem:[#allocation3 + $0x48] sm:$0xff]
    %v51 = vld [vmem:[#allocation3 + $0x50] sm:$0xff]
    %v52 = vld [vmem:[#allocation3 + $0x58] sm:$0xff]
    %v53 = vld [vmem:[#allocation3 + $0x60] sm:$0xff]
    %v54 = vld [vmem:[#allocation3 + $0x68] sm:$0xff]
    %v55 = vld [vmem:[#allocation3 + $0x70] sm:$0xff]
    %v56 = vld [vmem:[#allocation3 + $0x78] sm:$0xff]
    %v57 = vld [vmem:[%s0] sm:$0xff]
    %v58 = vld [vmem:[%s0 + $0x8] sm:$0xff]
    %v59 = vld [vmem:[%s0 + $0x10] sm:$0xff]
    %v60 = vld [vmem:[%s0 + $0x18] sm:$0xff]
    %v61 = vld [vmem:[%s0 + $0x20] sm:$0xff]
    %v62 = vld [vmem:[%s0 + $0x28] sm:$0xff]
    %v63 = vld [vmem:[%s0 + $0x30] sm:$0xff]
    %v64 = vld [vmem:[%s0 + $0x38] sm:$0xff]
    %v66 = vlaneseq
    %v67 = vshrl.u32 %v66, 7
    %v68 = vsub.s32 0, %v67
    %v69 = vrot.slane %v40, %v68
    %v70 = vlaneseq
    %v71 = vshrl.u32 %v70, 7
    %v72 = vsub.s32 1, %v71
    %v73 = vrot.slane %v40, %v72
    %vm76 = vcmask 261120
    %v78 = vsel %vm76, %v57, 0
    %v81 = vsel %vm76, %v58, 0
    %v84 = vsel %vm76, %v59, 0
    %v87 = vsel %vm76, %v60, 0
    %v90 = vsel %vm76, %v61, 0
    %v93 = vsel %vm76, %v62, 0
    %v96 = vsel %vm76, %v63, 0
    %v99 = vsel %vm76, %v64, 0
    %101 = vmatprep.subr.mxu0 %v33
    %102 = vmatpush1.msra.mxu0 %v32
    %103 = vmatprep.subr.mxu0 %v35
    %104 = vmatpush1.msra.mxu0 %v34
    %105 = vmatprep.subr.mxu0 %v37
    %106 = vmatpush1.msra.mxu0 %v36
    %107 = vmatprep.subr.mxu0 %v39
    %108 = vmatpush1.msra.mxu0 %v38
    %109 = vmatprep.subr.mxu0 0.0
    %110 = vmatpush1.msra.mxu0 0.0
    %111 = vmatprep.subr.mxu0 0.0
    %112 = vmatpush1.msra.mxu0 0.0
    %113 = vmatprep.subr.mxu0 0.0
    %114 = vmatpush1.msra.mxu0 0.0
    %115 = vmatprep.subr.mxu0 0.0
    %116 = vmatpush1.msra.mxu0 0.0
    %117 = vmatprep.subr.mxu0 0.0
    %118 = vmatpush1.msra.mxu0 0.0
    %119 = vmatprep.subr.mxu0 0.0
    %120 = vmatpush1.msra.mxu0 0.0
    %121 = vmatprep.subr.mxu0 0.0
    %122 = vmatpush1.msra.mxu0 0.0
    %123 = vmatprep.subr.mxu0 0.0
    %124 = vmatpush1.msra.mxu0 0.0
    %125 = vmatprep.subr.mxu0 0.0
    %126 = vmatpush1.msra.mxu0 0.0
    %127 = vmatprep.subr.mxu0 0.0
    %128 = vmatpush1.msra.mxu0 0.0
    %129 = vmatprep.subr.mxu0 0.0
    %130 = vmatpush1.msra.mxu0 0.0
    %131 = vmatprep.subr.mxu0 0.0
    %132 = vmatpush1.msra.mxu0 0.0
    %133 = vmatprep.subr.mxu0 0.0
    %134 = vmatpush1.msra.mxu0 0.0
    %135 = vmatprep.subr.mxu0 0.0
    %136 = vmatpush1.msra.mxu0 0.0
    %137 = vmatprep.subr.mxu0 0.0
    %138 = vmatpush1.msra.mxu0 0.0
    %139 = vmatprep.subr.mxu0 0.0
    %140 = vmatpush1.msra.mxu0 0.0
    %141 = vmatprep.subr.mxu0 0.0
    %142 = vmatpush1.msra.mxu0 0.0
    %143 = vmatprep.subr.mxu0 0.0
    %144 = vmatpush1.msra.mxu0 0.0
    %145 = vmatprep.subr.mxu0 0.0
    %146 = vmatpush1.msra.mxu0 0.0
    %147 = vmatprep.subr.mxu0 0.0
    %148 = vmatpush1.msra.mxu0 0.0
    %149 = vmatprep.subr.mxu0 0.0
    %150 = vmatpush1.msra.mxu0 0.0
    %151 = vmatprep.subr.mxu0 0.0
    %152 = vmatpush1.msra.mxu0 0.0
    %153 = vmatprep.subr.mxu0 0.0
    %154 = vmatpush1.msra.mxu0 0.0
    %155 = vmatprep.subr.mxu0 0.0
    %156 = vmatpush1.msra.mxu0 0.0
    %157 = vmatprep.subr.mxu0 0.0
    %158 = vmatpush1.msra.mxu0 0.0
    %159 = vmatprep.subr.mxu0 0.0
    %160 = vmatpush1.msra.mxu0 0.0
    %161 = vmatprep.subr.mxu0 0.0
    %162 = vmatpush1.msra.mxu0 0.0
    %163 = vmatprep.subr.mxu0 0.0
    %164 = vmatpush1.msra.mxu0 0.0
    %165 = vmatprep.mubr.f32.mxu0 0.0
    %166 = vmatmul.mubr.f32.gmra.mrb[0].mxu0 %v78
    %v167 = vpop.f32.mrb[0].mxu0
    %v168 = vadd.f32 %v69, %v167
    %v169 = vpop.f32.mrb[0].mxu0
    %v170 = vadd.f32 %v73, %v169
    %171 = vmatprep.mubr.f32.mxu0 0.0
    %172 = vmatmul.mubr.f32.gmra.mrb[0].mxu0 %v81
    %v173 = vpop.f32.mrb[0].mxu0
    %v174 = vadd.f32 %v69, %v173
    %v175 = vpop.f32.mrb[0].mxu0
    %v176 = vadd.f32 %v73, %v175
    %177 = vmatprep.mubr.f32.mxu0 0.0
    %178 = vmatmul.mubr.f32.gmra.mrb[0].mxu0 %v84
    %v179 = vpop.f32.mrb[0].mxu0
    %v180 = vadd.f32 %v69, %v179
    %v181 = vpop.f32.mrb[0].mxu0
    %v182 = vadd.f32 %v73, %v181
    %183 = vmatprep.mubr.f32.mxu0 0.0
    %184 = vmatmul.mubr.f32.gmra.mrb[0].mxu0 %v87
    %v185 = vpop.f32.mrb[0].mxu0
    %v186 = vadd.f32 %v69, %v185
    %v187 = vpop.f32.mrb[0].mxu0
    %v188 = vadd.f32 %v73, %v187
    %189 = vmatprep.mubr.f32.mxu0 0.0
    %190 = vmatmul.mubr.f32.gmra.mrb[0].mxu0 %v90
    %v191 = vpop.f32.mrb[0].mxu0
    %v192 = vadd.f32 %v69, %v191
    %v193 = vpop.f32.mrb[0].mxu0
    %v194 = vadd.f32 %v73, %v193
    %195 = vmatprep.mubr.f32.mxu0 0.0
    %196 = vmatmul.mubr.f32.gmra.mrb[0].mxu0 %v93
    %v197 = vpop.f32.mrb[0].mxu0
    %v198 = vadd.f32 %v69, %v197
    %v199 = vpop.f32.mrb[0].mxu0
    %v200 = vadd.f32 %v73, %v199
    %201 = vmatprep.mubr.f32.mxu0 0.0
    %202 = vmatmul.mubr.f32.gmra.mrb[0].mxu0 %v96
    %v203 = vpop.f32.mrb[0].mxu0
    %v204 = vadd.f32 %v69, %v203
    %v205 = vpop.f32.mrb[0].mxu0
    %v206 = vadd.f32 %v73, %v205
    %207 = vmatprep.mubr.f32.mxu0 0.0
    %208 = vmatmul.mubr.f32.gmra.mrb[0].mxu0 %v99
    %v209 = vpop.f32.mrb[0].mxu0
    %v210 = vadd.f32 %v69, %v209
    %v211 = vpop.f32.mrb[0].mxu0
    %v212 = vadd.f32 %v73, %v211
    %213 = vdwg.mxu0
    %214 = vst [vmem:[#allocation2] sm:$0xff] %v168
    %215 = vst [vmem:[#allocation2 + $0x8] sm:$0xff] %v170
    %216 = vst [vmem:[#allocation2 + $0x10] sm:$0xff] %v174
    %217 = vst [vmem:[#allocation2 + $0x18] sm:$0xff] %v176
    %218 = vst [vmem:[#allocation2 + $0x20] sm:$0xff] %v180
    %219 = vst [vmem:[#allocation2 + $0x28] sm:$0xff] %v182
    %220 = vst [vmem:[#allocation2 + $0x30] sm:$0xff] %v186
    %221 = vst [vmem:[#allocation2 + $0x38] sm:$0xff] %v188
    %222 = vst [vmem:[#allocation2 + $0x40] sm:$0xff] %v192
    %223 = vst [vmem:[#allocation2 + $0x48] sm:$0xff] %v194
    %224 = vst [vmem:[#allocation2 + $0x50] sm:$0xff] %v198
    %225 = vst [vmem:[#allocation2 + $0x58] sm:$0xff] %v200
    %226 = vst [vmem:[#allocation2 + $0x60] sm:$0xff] %v204
    %227 = vst [vmem:[#allocation2 + $0x68] sm:$0xff] %v206
    %228 = vst [vmem:[#allocation2 + $0x70] sm:$0xff] %v210
    %229 = vst [vmem:[#allocation2 + $0x78] sm:$0xff] %v212
    %s230 = smul.u32 0, 2
    %s231 = smul.addr %s230, 8
    %s232 = scalar_lea.vmem [#allocation2], %s231
    %v233 = vld [vmem:[%s232] sm:$0xff]
    %s234 = smul.u32 7, 2
    %s235 = smul.addr %s234, 8
    %s236 = scalar_lea.vmem [#allocation2], %s235
    %v237 = vld [vmem:[%s236 + $0x8] sm:$0xff]
    %vm238 = vcmask 523264
    %v240 = vsel %vm238, 0.0, 0
    %242 = vmatprep.subr.mxu0 %v42
    %243 = vmatpush1.msra.mxu0 %v41
    %244 = vmatprep.subr.mxu0 %v44
    %245 = vmatpush1.msra.mxu0 %v43
    %246 = vmatprep.subr.mxu0 %v46
    %247 = vmatpush1.msra.mxu0 %v45
    %248 = vmatprep.subr.mxu0 %v48
    %249 = vmatpush1.msra.mxu0 %v47
    %250 = vmatprep.subr.mxu0 %v50
    %251 = vmatpush1.msra.mxu0 %v49
    %252 = vmatprep.subr.mxu0 %v52
    %253 = vmatpush1.msra.mxu0 %v51
    %254 = vmatprep.subr.mxu0 %v54
    %255 = vmatpush1.msra.mxu0 %v53
    %256 = vmatprep.subr.mxu0 %v56
    %257 = vmatpush1.msra.mxu0 %v55
    %258 = vmatprep.subr.mxu0 0.0
    %259 = vmatpush1.msra.mxu0 0.0
    %260 = vmatprep.subr.mxu0 0.0
    %261 = vmatpush1.msra.mxu0 0.0
    %262 = vmatprep.subr.mxu0 0.0
    %263 = vmatpush1.msra.mxu0 0.0
    %264 = vmatprep.subr.mxu0 0.0
    %265 = vmatpush1.msra.mxu0 0.0
    %266 = vmatprep.subr.mxu0 0.0
    %267 = vmatpush1.msra.mxu0 0.0
    %268 = vmatprep.subr.mxu0 0.0
    %269 = vmatpush1.msra.mxu0 0.0
    %270 = vmatprep.subr.mxu0 0.0
    %271 = vmatpush1.msra.mxu0 0.0
    %272 = vmatprep.subr.mxu0 0.0
    %273 = vmatpush1.msra.mxu0 0.0
    %274 = vmatprep.subr.mxu0 0.0
    %275 = vmatpush1.msra.mxu0 0.0
    %276 = vmatprep.subr.mxu0 0.0
    %277 = vmatpush1.msra.mxu0 0.0
    %278 = vmatprep.subr.mxu0 0.0
    %279 = vmatpush1.msra.mxu0 0.0
    %280 = vmatprep.subr.mxu0 0.0
    %281 = vmatpush1.msra.mxu0 0.0
    %282 = vmatprep.subr.mxu0 0.0
    %283 = vmatpush1.msra.mxu0 0.0
    %284 = vmatprep.subr.mxu0 0.0
    %285 = vmatpush1.msra.mxu0 0.0
    %286 = vmatprep.subr.mxu0 0.0
    %287 = vmatpush1.msra.mxu0 0.0
    %288 = vmatprep.subr.mxu0 0.0
    %289 = vmatpush1.msra.mxu0 0.0
    %290 = vmatprep.subr.mxu0 0.0
    %291 = vmatpush1.msra.mxu0 0.0
    %292 = vmatprep.subr.mxu0 0.0
    %293 = vmatpush1.msra.mxu0 0.0
    %294 = vmatprep.subr.mxu0 0.0
    %295 = vmatpush1.msra.mxu0 0.0
    %296 = vmatprep.subr.mxu0 0.0
    %297 = vmatpush1.msra.mxu0 0.0
    %298 = vmatprep.subr.mxu0 0.0
    %299 = vmatpush1.msra.mxu0 0.0
    %300 = vmatprep.subr.mxu0 0.0
    %301 = vmatpush1.msra.mxu0 0.0
    %302 = vmatprep.subr.mxu0 0.0
    %303 = vmatpush1.msra.mxu0 0.0
    %304 = vmatprep.subr.mxu0 0.0
    %305 = vmatpush1.msra.mxu0 0.0
    %306 = vmatprep.mubr.f32.mxu0 0.0
    %307 = vmatmul.mubr.f32.gmra.mrb[0].mxu0 %v240
    %v308 = vpop.f32.mrb[0].mxu0
    %v309 = vadd.f32 0.0, %v308
    %v310 = vpop.f32.mrb[0].mxu0
    %v311 = vadd.f32 0.0, %v310
    %312 = vdwg.mxu0
    %v313 = vadd.f32 %v233, %v309
    %v314 = vadd.f32 %v237, %v311
    %v315 = vtanh.pop %v313
    %v316 = vxor.u32 %v313, 2147483648
    %v317 = vmul.f32 %v316, 1.442695
    %v318 = vpow.pop %v317
    %v319 = vadd.f32 %v318, 1.0
    %v320 = vrcp.pop %v319
    %v321 = vmul.f32 1.0, %v320
    %v322 = vtanh.pop %v314
    %v323 = vxor.u32 %v314, 2147483648
    %v324 = vmul.f32 %v323, 1.442695
    %v325 = vpow.pop %v324
    %v326 = vadd.f32 %v325, 1.0
    %v327 = vrcp.pop %v326
    %v328 = vmul.f32 1.0, %v327
    %v329 = vmul.f32 %v321, 0.0
    %331 = vrot.lane.b32.xlu0 %v315, 32
    %v332 = vpop.permute.xlu0 %331
    %v334 = vmul.f32 %v321, %v332
    %336 = vrot.lane.b32.xlu0 %v334, 32
    %v337 = vpop.permute.xlu0 %336
    %v339 = vadd.f32 %v329, %v337
    %v340 = vmul.f32 %v328, 0.0
    %342 = vrot.lane.b32.xlu0 %v322, 32
    %v343 = vpop.permute.xlu0 %342
    %v345 = vmul.f32 %v328, %v343
    %347 = vrot.lane.b32.xlu0 %v345, 32
    %v348 = vpop.permute.xlu0 %347
    %v350 = vadd.f32 %v340, %v348
    %352 = vrot.lane.b32.xlu0 %v339, 64
    %v353 = vpop.permute.xlu0 %352
    %356 = vrot.lane.b32.xlu0 %v350, 96
    %v357 = vpop.permute.xlu0 %356
    %v359 = vsel %vm76, %v353, %v357
    %361 = vrot.lane.b32.xlu0 %v321, 32
    %v362 = vpop.permute.xlu0 %361
    %365 = vrot.lane.b32.xlu0 %v328, 64
    %v366 = vpop.permute.xlu0 %365
    %v368 = vsel %vm76, %v362, %v366
    %v369 = vtanh.pop %v359
    %v370 = vmul.f32 %v368, %v369
    %s371 = smul.u32 1, 2
    %s372 = smul.addr %s371, 8
    %s373 = scalar_lea.vmem [#allocation2], %s372
    %v374 = vld [vmem:[%s373] sm:$0xff]
    %s375 = smul.u32 6, 2
    %s376 = smul.addr %s375, 8
    %s377 = scalar_lea.vmem [#allocation2], %s376
    %v378 = vld [vmem:[%s377 + $0x8] sm:$0xff]
    %v380 = vsel %vm238, %v370, 0
    %382 = vmatprep.subr.mxu0 %v42
    %383 = vmatpush1.msra.mxu0 %v41
    %384 = vmatprep.subr.mxu0 %v44
    %385 = vmatpush1.msra.mxu0 %v43
    %386 = vmatprep.subr.mxu0 %v46
    %387 = vmatpush1.msra.mxu0 %v45
    %388 = vmatprep.subr.mxu0 %v48
    %389 = vmatpush1.msra.mxu0 %v47
    %390 = vmatprep.subr.mxu0 %v50
    %391 = vmatpush1.msra.mxu0 %v49
    %392 = vmatprep.subr.mxu0 %v52
    %393 = vmatpush1.msra.mxu0 %v51
    %394 = vmatprep.subr.mxu0 %v54
    %395 = vmatpush1.msra.mxu0 %v53
    %396 = vmatprep.subr.mxu0 %v56
    %397 = vmatpush1.msra.mxu0 %v55
    %398 = vmatprep.subr.mxu0 0.0
    %399 = vmatpush1.msra.mxu0 0.0
    %400 = vmatprep.subr.mxu0 0.0
    %401 = vmatpush1.msra.mxu0 0.0
    %402 = vmatprep.subr.mxu0 0.0
    %403 = vmatpush1.msra.mxu0 0.0
    %404 = vmatprep.subr.mxu0 0.0
    %405 = vmatpush1.msra.mxu0 0.0
    %406 = vmatprep.subr.mxu0 0.0
    %407 = vmatpush1.msra.mxu0 0.0
    %408 = vmatprep.subr.mxu0 0.0
    %409 = vmatpush1.msra.mxu0 0.0
    %410 = vmatprep.subr.mxu0 0.0
    %411 = vmatpush1.msra.mxu0 0.0
    %412 = vmatprep.subr.mxu0 0.0
    %413 = vmatpush1.msra.mxu0 0.0
    %414 = vmatprep.subr.mxu0 0.0
    %415 = vmatpush1.msra.mxu0 0.0
    %416 = vmatprep.subr.mxu0 0.0
    %417 = vmatpush1.msra.mxu0 0.0
    %418 = vmatprep.subr.mxu0 0.0
    %419 = vmatpush1.msra.mxu0 0.0
    %420 = vmatprep.subr.mxu0 0.0
    %421 = vmatpush1.msra.mxu0 0.0
    %422 = vmatprep.subr.mxu0 0.0
    %423 = vmatpush1.msra.mxu0 0.0
    %424 = vmatprep.subr.mxu0 0.0
    %425 = vmatpush1.msra.mxu0 0.0
    %426 = vmatprep.subr.mxu0 0.0
    %427 = vmatpush1.msra.mxu0 0.0
    %428 = vmatprep.subr.mxu0 0.0
    %429 = vmatpush1.msra.mxu0 0.0
    %430 = vmatprep.subr.mxu0 0.0
    %431 = vmatpush1.msra.mxu0 0.0
    %432 = vmatprep.subr.mxu0 0.0
    %433 = vmatpush1.msra.mxu0 0.0
    %434 = vmatprep.subr.mxu0 0.0
    %435 = vmatpush1.msra.mxu0 0.0
    %436 = vmatprep.subr.mxu0 0.0
    %437 = vmatpush1.msra.mxu0 0.0
    %438 = vmatprep.subr.mxu0 0.0
    %439 = vmatpush1.msra.mxu0 0.0
    %440 = vmatprep.subr.mxu0 0.0
    %441 = vmatpush1.msra.mxu0 0.0
    %442 = vmatprep.subr.mxu0 0.0
    %443 = vmatpush1.msra.mxu0 0.0
    %444 = vmatprep.subr.mxu0 0.0
    %445 = vmatpush1.msra.mxu0 0.0
    %446 = vmatprep.mubr.f32.mxu0 0.0
    %447 = vmatmul.mubr.f32.gmra.mrb[0].mxu0 %v380
    %v448 = vpop.f32.mrb[0].mxu0
    %v449 = vadd.f32 0.0, %v448
    %v450 = vpop.f32.mrb[0].mxu0
    %v451 = vadd.f32 0.0, %v450
    %452 = vdwg.mxu0
    %v453 = vadd.f32 %v374, %v449
    %v454 = vadd.f32 %v378, %v451
    %v455 = vtanh.pop %v453
    %v456 = vxor.u32 %v453, 2147483648
    %v457 = vmul.f32 %v456, 1.442695
    %v458 = vpow.pop %v457
    %v459 = vadd.f32 %v458, 1.0
    %v460 = vrcp.pop %v459
    %v461 = vmul.f32 1.0, %v460
    %v462 = vtanh.pop %v454
    %v463 = vxor.u32 %v454, 2147483648
    %v464 = vmul.f32 %v463, 1.442695
    %v465 = vpow.pop %v464
    %v466 = vadd.f32 %v465, 1.0
    %v467 = vrcp.pop %v466
    %v468 = vmul.f32 1.0, %v467
    %470 = vrot.lane.b32.xlu0 %v359, 64
    %v471 = vpop.permute.xlu0 %470
    %v473 = vmul.f32 %v461, %v471
    %475 = vrot.lane.b32.xlu0 %v455, 32
    %v476 = vpop.permute.xlu0 %475
    %v478 = vmul.f32 %v461, %v476
    %480 = vrot.lane.b32.xlu0 %v478, 32
    %v481 = vpop.permute.xlu0 %480
    %v483 = vadd.f32 %v473, %v481
    %484 = vrot.lane.b32.xlu0 %v359, 32
    %v485 = vpop.permute.xlu0 %484
    %v487 = vmul.f32 %v468, %v485
    %489 = vrot.lane.b32.xlu0 %v462, 32
    %v490 = vpop.permute.xlu0 %489
    %v492 = vmul.f32 %v468, %v490
    %494 = vrot.lane.b32.xlu0 %v492, 32
    %v495 = vpop.permute.xlu0 %494
    %v497 = vadd.f32 %v487, %v495
    %499 = vrot.lane.b32.xlu0 %v483, 64
    %v500 = vpop.permute.xlu0 %499
    %503 = vrot.lane.b32.xlu0 %v497, 96
    %v504 = vpop.permute.xlu0 %503
    %v506 = vsel %vm76, %v500, %v504
    %508 = vrot.lane.b32.xlu0 %v461, 32
    %v509 = vpop.permute.xlu0 %508
    %512 = vrot.lane.b32.xlu0 %v468, 64
    %v513 = vpop.permute.xlu0 %512
    %v515 = vsel %vm76, %v509, %v513
    %v516 = vtanh.pop %v506
    %v517 = vmul.f32 %v515, %v516
    %s518 = smul.u32 2, 2
    %s519 = smul.addr %s518, 8
    %s520 = scalar_lea.vmem [#allocation2], %s519
    %v521 = vld [vmem:[%s520] sm:$0xff]
    %s522 = smul.u32 5, 2
    %s523 = smul.addr %s522, 8
    %s524 = scalar_lea.vmem [#allocation2], %s523
    %v525 = vld [vmem:[%s524 + $0x8] sm:$0xff]
    %v527 = vsel %vm238, %v517, 0
    %529 = vmatprep.subr.mxu0 %v42
    %530 = vmatpush1.msra.mxu0 %v41
    %531 = vmatprep.subr.mxu0 %v44
    %532 = vmatpush1.msra.mxu0 %v43
    %533 = vmatprep.subr.mxu0 %v46
    %534 = vmatpush1.msra.mxu0 %v45
    %535 = vmatprep.subr.mxu0 %v48
    %536 = vmatpush1.msra.mxu0 %v47
    %537 = vmatprep.subr.mxu0 %v50
    %538 = vmatpush1.msra.mxu0 %v49
    %539 = vmatprep.subr.mxu0 %v52
    %540 = vmatpush1.msra.mxu0 %v51
    %541 = vmatprep.subr.mxu0 %v54
    %542 = vmatpush1.msra.mxu0 %v53
    %543 = vmatprep.subr.mxu0 %v56
    %544 = vmatpush1.msra.mxu0 %v55
    %545 = vmatprep.subr.mxu0 0.0
    %546 = vmatpush1.msra.mxu0 0.0
    %547 = vmatprep.subr.mxu0 0.0
    %548 = vmatpush1.msra.mxu0 0.0
    %549 = vmatprep.subr.mxu0 0.0
    %550 = vmatpush1.msra.mxu0 0.0
    %551 = vmatprep.subr.mxu0 0.0
    %552 = vmatpush1.msra.mxu0 0.0
    %553 = vmatprep.subr.mxu0 0.0
    %554 = vmatpush1.msra.mxu0 0.0
    %555 = vmatprep.subr.mxu0 0.0
    %556 = vmatpush1.msra.mxu0 0.0
    %557 = vmatprep.subr.mxu0 0.0
    %558 = vmatpush1.msra.mxu0 0.0
    %559 = vmatprep.subr.mxu0 0.0
    %560 = vmatpush1.msra.mxu0 0.0
    %561 = vmatprep.subr.mxu0 0.0
    %562 = vmatpush1.msra.mxu0 0.0
    %563 = vmatprep.subr.mxu0 0.0
    %564 = vmatpush1.msra.mxu0 0.0
    %565 = vmatprep.subr.mxu0 0.0
    %566 = vmatpush1.msra.mxu0 0.0
    %567 = vmatprep.subr.mxu0 0.0
    %568 = vmatpush1.msra.mxu0 0.0
    %569 = vmatprep.subr.mxu0 0.0
    %570 = vmatpush1.msra.mxu0 0.0
    %571 = vmatprep.subr.mxu0 0.0
    %572 = vmatpush1.msra.mxu0 0.0
    %573 = vmatprep.subr.mxu0 0.0
    %574 = vmatpush1.msra.mxu0 0.0
    %575 = vmatprep.subr.mxu0 0.0
    %576 = vmatpush1.msra.mxu0 0.0
    %577 = vmatprep.subr.mxu0 0.0
    %578 = vmatpush1.msra.mxu0 0.0
    %579 = vmatprep.subr.mxu0 0.0
    %580 = vmatpush1.msra.mxu0 0.0
    %581 = vmatprep.subr.mxu0 0.0
    %582 = vmatpush1.msra.mxu0 0.0
    %583 = vmatprep.subr.mxu0 0.0
    %584 = vmatpush1.msra.mxu0 0.0
    %585 = vmatprep.subr.mxu0 0.0
    %586 = vmatpush1.msra.mxu0 0.0
    %587 = vmatprep.subr.mxu0 0.0
    %588 = vmatpush1.msra.mxu0 0.0
    %589 = vmatprep.subr.mxu0 0.0
    %590 = vmatpush1.msra.mxu0 0.0
    %591 = vmatprep.subr.mxu0 0.0
    %592 = vmatpush1.msra.mxu0 0.0
    %593 = vmatprep.mubr.f32.mxu0 0.0
    %594 = vmatmul.mubr.f32.gmra.mrb[0].mxu0 %v527
    %v595 = vpop.f32.mrb[0].mxu0
    %v596 = vadd.f32 0.0, %v595
    %v597 = vpop.f32.mrb[0].mxu0
    %v598 = vadd.f32 0.0, %v597
    %599 = vdwg.mxu0
    %v600 = vadd.f32 %v521, %v596
    %v601 = vadd.f32 %v525, %v598
    %v602 = vtanh.pop %v600
    %v603 = vxor.u32 %v600, 2147483648
    %v604 = vmul.f32 %v603, 1.442695
    %v605 = vpow.pop %v604
    %v606 = vadd.f32 %v605, 1.0
    %v607 = vrcp.pop %v606
    %v608 = vmul.f32 1.0, %v607
    %v609 = vtanh.pop %v601
    %v610 = vxor.u32 %v601, 2147483648
    %v611 = vmul.f32 %v610, 1.442695
    %v612 = vpow.pop %v611
    %v613 = vadd.f32 %v612, 1.0
    %v614 = vrcp.pop %v613
    %v615 = vmul.f32 1.0, %v614
    %617 = vrot.lane.b32.xlu0 %v506, 64
    %v618 = vpop.permute.xlu0 %617
    %v620 = vmul.f32 %v608, %v618
    %622 = vrot.lane.b32.xlu0 %v602, 32
    %v623 = vpop.permute.xlu0 %622
    %v625 = vmul.f32 %v608, %v623
    %627 = vrot.lane.b32.xlu0 %v625, 32
    %v628 = vpop.permute.xlu0 %627
    %v630 = vadd.f32 %v620, %v628
    %631 = vrot.lane.b32.xlu0 %v506, 32
    %v632 = vpop.permute.xlu0 %631
    %v634 = vmul.f32 %v615, %v632
    %636 = vrot.lane.b32.xlu0 %v609, 32
    %v637 = vpop.permute.xlu0 %636
    %v639 = vmul.f32 %v615, %v637
    %641 = vrot.lane.b32.xlu0 %v639, 32
    %v642 = vpop.permute.xlu0 %641
    %v644 = vadd.f32 %v634, %v642
    %646 = vrot.lane.b32.xlu0 %v630, 64
    %v647 = vpop.permute.xlu0 %646
    %650 = vrot.lane.b32.xlu0 %v644, 96
    %v651 = vpop.permute.xlu0 %650
    %v653 = vsel %vm76, %v647, %v651
    %655 = vrot.lane.b32.xlu0 %v608, 32
    %v656 = vpop.permute.xlu0 %655
    %659 = vrot.lane.b32.xlu0 %v615, 64
    %v660 = vpop.permute.xlu0 %659
    %v662 = vsel %vm76, %v656, %v660
    %v663 = vtanh.pop %v653
    %v664 = vmul.f32 %v662, %v663
    %s665 = smul.u32 3, 2
    %s666 = smul.addr %s665, 8
    %s667 = scalar_lea.vmem [#allocation2], %s666
    %v668 = vld [vmem:[%s667] sm:$0xff]
    %s669 = smul.u32 4, 2
    %s670 = smul.addr %s669, 8
    %s671 = scalar_lea.vmem [#allocation2], %s670
    %v672 = vld [vmem:[%s671 + $0x8] sm:$0xff]
    %v674 = vsel %vm238, %v664, 0
    %676 = vmatprep.subr.mxu0 %v42
    %677 = vmatpush1.msra.mxu0 %v41
    %678 = vmatprep.subr.mxu0 %v44
    %679 = vmatpush1.msra.mxu0 %v43
    %680 = vmatprep.subr.mxu0 %v46
    %681 = vmatpush1.msra.mxu0 %v45
    %682 = vmatprep.subr.mxu0 %v48
    %683 = vmatpush1.msra.mxu0 %v47
    %684 = vmatprep.subr.mxu0 %v50
    %685 = vmatpush1.msra.mxu0 %v49
    %686 = vmatprep.subr.mxu0 %v52
    %687 = vmatpush1.msra.mxu0 %v51
    %688 = vmatprep.subr.mxu0 %v54
    %689 = vmatpush1.msra.mxu0 %v53
    %690 = vmatprep.subr.mxu0 %v56
    %691 = vmatpush1.msra.mxu0 %v55
    %692 = vmatprep.subr.mxu0 0.0
    %693 = vmatpush1.msra.mxu0 0.0
    %694 = vmatprep.subr.mxu0 0.0
    %695 = vmatpush1.msra.mxu0 0.0
    %696 = vmatprep.subr.mxu0 0.0
    %697 = vmatpush1.msra.mxu0 0.0
    %698 = vmatprep.subr.mxu0 0.0
    %699 = vmatpush1.msra.mxu0 0.0
    %700 = vmatprep.subr.mxu0 0.0
    %701 = vmatpush1.msra.mxu0 0.0
    %702 = vmatprep.subr.mxu0 0.0
    %703 = vmatpush1.msra.mxu0 0.0
    %704 = vmatprep.subr.mxu0 0.0
    %705 = vmatpush1.msra.mxu0 0.0
    %706 = vmatprep.subr.mxu0 0.0
    %707 = vmatpush1.msra.mxu0 0.0
    %708 = vmatprep.subr.mxu0 0.0
    %709 = vmatpush1.msra.mxu0 0.0
    %710 = vmatprep.subr.mxu0 0.0
    %711 = vmatpush1.msra.mxu0 0.0
    %712 = vmatprep.subr.mxu0 0.0
    %713 = vmatpush1.msra.mxu0 0.0
    %714 = vmatprep.subr.mxu0 0.0
    %715 = vmatpush1.msra.mxu0 0.0
    %716 = vmatprep.subr.mxu0 0.0
    %717 = vmatpush1.msra.mxu0 0.0
    %718 = vmatprep.subr.mxu0 0.0
    %719 = vmatpush1.msra.mxu0 0.0
    %720 = vmatprep.subr.mxu0 0.0
    %721 = vmatpush1.msra.mxu0 0.0
    %722 = vmatprep.subr.mxu0 0.0
    %723 = vmatpush1.msra.mxu0 0.0
    %724 = vmatprep.subr.mxu0 0.0
    %725 = vmatpush1.msra.mxu0 0.0
    %726 = vmatprep.subr.mxu0 0.0
    %727 = vmatpush1.msra.mxu0 0.0
    %728 = vmatprep.subr.mxu0 0.0
    %729 = vmatpush1.msra.mxu0 0.0
    %730 = vmatprep.subr.mxu0 0.0
    %731 = vmatpush1.msra.mxu0 0.0
    %732 = vmatprep.subr.mxu0 0.0
    %733 = vmatpush1.msra.mxu0 0.0
    %734 = vmatprep.subr.mxu0 0.0
    %735 = vmatpush1.msra.mxu0 0.0
    %736 = vmatprep.subr.mxu0 0.0
    %737 = vmatpush1.msra.mxu0 0.0
    %738 = vmatprep.subr.mxu0 0.0
    %739 = vmatpush1.msra.mxu0 0.0
    %740 = vmatprep.mubr.f32.mxu0 0.0
    %741 = vmatmul.mubr.f32.gmra.mrb[0].mxu0 %v674
    %v742 = vpop.f32.mrb[0].mxu0
    %v743 = vadd.f32 0.0, %v742
    %v744 = vpop.f32.mrb[0].mxu0
    %v745 = vadd.f32 0.0, %v744
    %746 = vdwg.mxu0
    %v747 = vadd.f32 %v668, %v743
    %v748 = vadd.f32 %v672, %v745
    %v749 = vtanh.pop %v747
    %v750 = vxor.u32 %v747, 2147483648
    %v751 = vmul.f32 %v750, 1.442695
    %v752 = vpow.pop %v751
    %v753 = vadd.f32 %v752, 1.0
    %v754 = vrcp.pop %v753
    %v755 = vmul.f32 1.0, %v754
    %v756 = vtanh.pop %v748
    %v757 = vxor.u32 %v748, 2147483648
    %v758 = vmul.f32 %v757, 1.442695
    %v759 = vpow.pop %v758
    %v760 = vadd.f32 %v759, 1.0
    %v761 = vrcp.pop %v760
    %v762 = vmul.f32 1.0, %v761
    %764 = vrot.lane.b32.xlu0 %v653, 64
    %v765 = vpop.permute.xlu0 %764
    %v767 = vmul.f32 %v755, %v765
    %769 = vrot.lane.b32.xlu0 %v749, 32
    %v770 = vpop.permute.xlu0 %769
    %v772 = vmul.f32 %v755, %v770
    %774 = vrot.lane.b32.xlu0 %v772, 32
    %v775 = vpop.permute.xlu0 %774
    %v777 = vadd.f32 %v767, %v775
    %778 = vrot.lane.b32.xlu0 %v653, 32
    %v779 = vpop.permute.xlu0 %778
    %v781 = vmul.f32 %v762, %v779
    %783 = vrot.lane.b32.xlu0 %v756, 32
    %v784 = vpop.permute.xlu0 %783
    %v786 = vmul.f32 %v762, %v784
    %788 = vrot.lane.b32.xlu0 %v786, 32
    %v789 = vpop.permute.xlu0 %788
    %v791 = vadd.f32 %v781, %v789
    %793 = vrot.lane.b32.xlu0 %v777, 64
    %v794 = vpop.permute.xlu0 %793
    %797 = vrot.lane.b32.xlu0 %v791, 96
    %v798 = vpop.permute.xlu0 %797
    %v800 = vsel %vm76, %v794, %v798
    %802 = vrot.lane.b32.xlu0 %v755, 32
    %v803 = vpop.permute.xlu0 %802
    %806 = vrot.lane.b32.xlu0 %v762, 64
    %v807 = vpop.permute.xlu0 %806
    %v809 = vsel %vm76, %v803, %v807
    %v810 = vtanh.pop %v800
    %v811 = vmul.f32 %v809, %v810
    %v812 = vld [vmem:[%s671] sm:$0xff]
    %v813 = vld [vmem:[%s667 + $0x8] sm:$0xff]
    %v815 = vsel %vm238, %v811, 0
    %817 = vmatprep.subr.mxu0 %v42
    %818 = vmatpush1.msra.mxu0 %v41
    %819 = vmatprep.subr.mxu0 %v44
    %820 = vmatpush1.msra.mxu0 %v43
    %821 = vmatprep.subr.mxu0 %v46
    %822 = vmatpush1.msra.mxu0 %v45
    %823 = vmatprep.subr.mxu0 %v48
    %824 = vmatpush1.msra.mxu0 %v47
    %825 = vmatprep.subr.mxu0 %v50
    %826 = vmatpush1.msra.mxu0 %v49
    %827 = vmatprep.subr.mxu0 %v52
    %828 = vmatpush1.msra.mxu0 %v51
    %829 = vmatprep.subr.mxu0 %v54
    %830 = vmatpush1.msra.mxu0 %v53
    %831 = vmatprep.subr.mxu0 %v56
    %832 = vmatpush1.msra.mxu0 %v55
    %833 = vmatprep.subr.mxu0 0.0
    %834 = vmatpush1.msra.mxu0 0.0
    %835 = vmatprep.subr.mxu0 0.0
    %836 = vmatpush1.msra.mxu0 0.0
    %837 = vmatprep.subr.mxu0 0.0
    %838 = vmatpush1.msra.mxu0 0.0
    %839 = vmatprep.subr.mxu0 0.0
    %840 = vmatpush1.msra.mxu0 0.0
    %841 = vmatprep.subr.mxu0 0.0
    %842 = vmatpush1.msra.mxu0 0.0
    %843 = vmatprep.subr.mxu0 0.0
    %844 = vmatpush1.msra.mxu0 0.0
    %845 = vmatprep.subr.mxu0 0.0
    %846 = vmatpush1.msra.mxu0 0.0
    %847 = vmatprep.subr.mxu0 0.0
    %848 = vmatpush1.msra.mxu0 0.0
    %849 = vmatprep.subr.mxu0 0.0
    %850 = vmatpush1.msra.mxu0 0.0
    %851 = vmatprep.subr.mxu0 0.0
    %852 = vmatpush1.msra.mxu0 0.0
    %853 = vmatprep.subr.mxu0 0.0
    %854 = vmatpush1.msra.mxu0 0.0
    %855 = vmatprep.subr.mxu0 0.0
    %856 = vmatpush1.msra.mxu0 0.0
    %857 = vmatprep.subr.mxu0 0.0
    %858 = vmatpush1.msra.mxu0 0.0
    %859 = vmatprep.subr.mxu0 0.0
    %860 = vmatpush1.msra.mxu0 0.0
    %861 = vmatprep.subr.mxu0 0.0
    %862 = vmatpush1.msra.mxu0 0.0
    %863 = vmatprep.subr.mxu0 0.0
    %864 = vmatpush1.msra.mxu0 0.0
    %865 = vmatprep.subr.mxu0 0.0
    %866 = vmatpush1.msra.mxu0 0.0
    %867 = vmatprep.subr.mxu0 0.0
    %868 = vmatpush1.msra.mxu0 0.0
    %869 = vmatprep.subr.mxu0 0.0
    %870 = vmatpush1.msra.mxu0 0.0
    %871 = vmatprep.subr.mxu0 0.0
    %872 = vmatpush1.msra.mxu0 0.0
    %873 = vmatprep.subr.mxu0 0.0
    %874 = vmatpush1.msra.mxu0 0.0
    %875 = vmatprep.subr.mxu0 0.0
    %876 = vmatpush1.msra.mxu0 0.0
    %877 = vmatprep.subr.mxu0 0.0
    %878 = vmatpush1.msra.mxu0 0.0
    %879 = vmatprep.subr.mxu0 0.0
    %880 = vmatpush1.msra.mxu0 0.0
    %881 = vmatprep.mubr.f32.mxu0 0.0
    %882 = vmatmul.mubr.f32.gmra.mrb[0].mxu0 %v815
    %v883 = vpop.f32.mrb[0].mxu0
    %v884 = vadd.f32 0.0, %v883
    %v885 = vpop.f32.mrb[0].mxu0
    %v886 = vadd.f32 0.0, %v885
    %887 = vdwg.mxu0
    %v888 = vadd.f32 %v812, %v884
    %v889 = vadd.f32 %v813, %v886
    %v890 = vtanh.pop %v888
    %v891 = vxor.u32 %v888, 2147483648
    %v892 = vmul.f32 %v891, 1.442695
    %v893 = vpow.pop %v892
    %v894 = vadd.f32 %v893, 1.0
    %v895 = vrcp.pop %v894
    %v896 = vmul.f32 1.0, %v895
    %v897 = vtanh.pop %v889
    %v898 = vxor.u32 %v889, 2147483648
    %v899 = vmul.f32 %v898, 1.442695
    %v900 = vpow.pop %v899
    %v901 = vadd.f32 %v900, 1.0
    %v902 = vrcp.pop %v901
    %v903 = vmul.f32 1.0, %v902
    %905 = vrot.lane.b32.xlu0 %v800, 64
    %v906 = vpop.permute.xlu0 %905
    %v908 = vmul.f32 %v896, %v906
    %910 = vrot.lane.b32.xlu0 %v890, 32
    %v911 = vpop.permute.xlu0 %910
    %v913 = vmul.f32 %v896, %v911
    %915 = vrot.lane.b32.xlu0 %v913, 32
    %v916 = vpop.permute.xlu0 %915
    %v918 = vadd.f32 %v908, %v916
    %919 = vrot.lane.b32.xlu0 %v800, 32
    %v920 = vpop.permute.xlu0 %919
    %v922 = vmul.f32 %v903, %v920
    %924 = vrot.lane.b32.xlu0 %v897, 32
    %v925 = vpop.permute.xlu0 %924
    %v927 = vmul.f32 %v903, %v925
    %929 = vrot.lane.b32.xlu0 %v927, 32
    %v930 = vpop.permute.xlu0 %929
    %v932 = vadd.f32 %v922, %v930
    %934 = vrot.lane.b32.xlu0 %v918, 64
    %v935 = vpop.permute.xlu0 %934
    %938 = vrot.lane.b32.xlu0 %v932, 96
    %v939 = vpop.permute.xlu0 %938
    %v941 = vsel %vm76, %v935, %v939
    %943 = vrot.lane.b32.xlu0 %v896, 32
    %v944 = vpop.permute.xlu0 %943
    %947 = vrot.lane.b32.xlu0 %v903, 64
    %v948 = vpop.permute.xlu0 %947
    %v950 = vsel %vm76, %v944, %v948
    %v951 = vtanh.pop %v941
    %v952 = vmul.f32 %v950, %v951
    %v953 = vld [vmem:[%s524] sm:$0xff]
    %v954 = vld [vmem:[%s520 + $0x8] sm:$0xff]
    %v956 = vsel %vm238, %v952, 0
    %958 = vmatprep.subr.mxu0 %v42
    %959 = vmatpush1.msra.mxu0 %v41
    %960 = vmatprep.subr.mxu0 %v44
    %961 = vmatpush1.msra.mxu0 %v43
    %962 = vmatprep.subr.mxu0 %v46
    %963 = vmatpush1.msra.mxu0 %v45
    %964 = vmatprep.subr.mxu0 %v48
    %965 = vmatpush1.msra.mxu0 %v47
    %966 = vmatprep.subr.mxu0 %v50
    %967 = vmatpush1.msra.mxu0 %v49
    %968 = vmatprep.subr.mxu0 %v52
    %969 = vmatpush1.msra.mxu0 %v51
    %970 = vmatprep.subr.mxu0 %v54
    %971 = vmatpush1.msra.mxu0 %v53
    %972 = vmatprep.subr.mxu0 %v56
    %973 = vmatpush1.msra.mxu0 %v55
    %974 = vmatprep.subr.mxu0 0.0
    %975 = vmatpush1.msra.mxu0 0.0
    %976 = vmatprep.subr.mxu0 0.0
    %977 = vmatpush1.msra.mxu0 0.0
    %978 = vmatprep.subr.mxu0 0.0
    %979 = vmatpush1.msra.mxu0 0.0
    %980 = vmatprep.subr.mxu0 0.0
    %981 = vmatpush1.msra.mxu0 0.0
    %982 = vmatprep.subr.mxu0 0.0
    %983 = vmatpush1.msra.mxu0 0.0
    %984 = vmatprep.subr.mxu0 0.0
    %985 = vmatpush1.msra.mxu0 0.0
    %986 = vmatprep.subr.mxu0 0.0
    %987 = vmatpush1.msra.mxu0 0.0
    %988 = vmatprep.subr.mxu0 0.0
    %989 = vmatpush1.msra.mxu0 0.0
    %990 = vmatprep.subr.mxu0 0.0
    %991 = vmatpush1.msra.mxu0 0.0
    %992 = vmatprep.subr.mxu0 0.0
    %993 = vmatpush1.msra.mxu0 0.0
    %994 = vmatprep.subr.mxu0 0.0
    %995 = vmatpush1.msra.mxu0 0.0
    %996 = vmatprep.subr.mxu0 0.0
    %997 = vmatpush1.msra.mxu0 0.0
    %998 = vmatprep.subr.mxu0 0.0
    %999 = vmatpush1.msra.mxu0 0.0
    %1000 = vmatprep.subr.mxu0 0.0
    %1001 = vmatpush1.msra.mxu0 0.0
    %1002 = vmatprep.subr.mxu0 0.0
    %1003 = vmatpush1.msra.mxu0 0.0
    %1004 = vmatprep.subr.mxu0 0.0
    %1005 = vmatpush1.msra.mxu0 0.0
    %1006 = vmatprep.subr.mxu0 0.0
    %1007 = vmatpush1.msra.mxu0 0.0
    %1008 = vmatprep.subr.mxu0 0.0
    %1009 = vmatpush1.msra.mxu0 0.0
    %1010 = vmatprep.subr.mxu0 0.0
    %1011 = vmatpush1.msra.mxu0 0.0
    %1012 = vmatprep.subr.mxu0 0.0
    %1013 = vmatpush1.msra.mxu0 0.0
    %1014 = vmatprep.subr.mxu0 0.0
    %1015 = vmatpush1.msra.mxu0 0.0
    %1016 = vmatprep.subr.mxu0 0.0
    %1017 = vmatpush1.msra.mxu0 0.0
    %1018 = vmatprep.subr.mxu0 0.0
    %1019 = vmatpush1.msra.mxu0 0.0
    %1020 = vmatprep.subr.mxu0 0.0
    %1021 = vmatpush1.msra.mxu0 0.0
    %1022 = vmatprep.mubr.f32.mxu0 0.0
    %1023 = vmatmul.mubr.f32.gmra.mrb[0].mxu0 %v956
    %v1024 = vpop.f32.mrb[0].mxu0
    %v1025 = vadd.f32 0.0, %v1024
    %v1026 = vpop.f32.mrb[0].mxu0
    %v1027 = vadd.f32 0.0, %v1026
    %1028 = vdwg.mxu0
    %v1029 = vadd.f32 %v953, %v1025
    %v1030 = vadd.f32 %v954, %v1027
    %v1031 = vtanh.pop %v1029
    %v1032 = vxor.u32 %v1029, 2147483648
    %v1033 = vmul.f32 %v1032, 1.442695
    %v1034 = vpow.pop %v1033
    %v1035 = vadd.f32 %v1034, 1.0
    %v1036 = vrcp.pop %v1035
    %v1037 = vmul.f32 1.0, %v1036
    %v1038 = vtanh.pop %v1030
    %v1039 = vxor.u32 %v1030, 2147483648
    %v1040 = vmul.f32 %v1039, 1.442695
    %v1041 = vpow.pop %v1040
    %v1042 = vadd.f32 %v1041, 1.0
    %v1043 = vrcp.pop %v1042
    %v1044 = vmul.f32 1.0, %v1043
    %1046 = vrot.lane.b32.xlu0 %v941, 64
    %v1047 = vpop.permute.xlu0 %1046
    %v1049 = vmul.f32 %v1037, %v1047
    %1051 = vrot.lane.b32.xlu0 %v1031, 32
    %v1052 = vpop.permute.xlu0 %1051
    %v1054 = vmul.f32 %v1037, %v1052
    %1056 = vrot.lane.b32.xlu0 %v1054, 32
    %v1057 = vpop.permute.xlu0 %1056
    %v1059 = vadd.f32 %v1049, %v1057
    %1060 = vrot.lane.b32.xlu0 %v941, 32
    %v1061 = vpop.permute.xlu0 %1060
    %v1063 = vmul.f32 %v1044, %v1061
    %1065 = vrot.lane.b32.xlu0 %v1038, 32
    %v1066 = vpop.permute.xlu0 %1065
    %v1068 = vmul.f32 %v1044, %v1066
    %1070 = vrot.lane.b32.xlu0 %v1068, 32
    %v1071 = vpop.permute.xlu0 %1070
    %v1073 = vadd.f32 %v1063, %v1071
    %1075 = vrot.lane.b32.xlu0 %v1059, 64
    %v1076 = vpop.permute.xlu0 %1075
    %1079 = vrot.lane.b32.xlu0 %v1073, 96
    %v1080 = vpop.permute.xlu0 %1079
    %v1082 = vsel %vm76, %v1076, %v1080
    %1084 = vrot.lane.b32.xlu0 %v1037, 32
    %v1085 = vpop.permute.xlu0 %1084
    %1088 = vrot.lane.b32.xlu0 %v1044, 64
    %v1089 = vpop.permute.xlu0 %1088
    %v1091 = vsel %vm76, %v1085, %v1089
    %v1092 = vtanh.pop %v1082
    %v1093 = vmul.f32 %v1091, %v1092
    %v1094 = vld [vmem:[%s377] sm:$0xff]
    %v1095 = vld [vmem:[%s373 + $0x8] sm:$0xff]
    %v1097 = vsel %vm238, %v1093, 0
    %1099 = vmatprep.subr.mxu0 %v42
    %1100 = vmatpush1.msra.mxu0 %v41
    %1101 = vmatprep.subr.mxu0 %v44
    %1102 = vmatpush1.msra.mxu0 %v43
    %1103 = vmatprep.subr.mxu0 %v46
    %1104 = vmatpush1.msra.mxu0 %v45
    %1105 = vmatprep.subr.mxu0 %v48
    %1106 = vmatpush1.msra.mxu0 %v47
    %1107 = vmatprep.subr.mxu0 %v50
    %1108 = vmatpush1.msra.mxu0 %v49
    %1109 = vmatprep.subr.mxu0 %v52
    %1110 = vmatpush1.msra.mxu0 %v51
    %1111 = vmatprep.subr.mxu0 %v54
    %1112 = vmatpush1.msra.mxu0 %v53
    %1113 = vmatprep.subr.mxu0 %v56
    %1114 = vmatpush1.msra.mxu0 %v55
    %1115 = vmatprep.subr.mxu0 0.0
    %1116 = vmatpush1.msra.mxu0 0.0
    %1117 = vmatprep.subr.mxu0 0.0
    %1118 = vmatpush1.msra.mxu0 0.0
    %1119 = vmatprep.subr.mxu0 0.0
    %1120 = vmatpush1.msra.mxu0 0.0
    %1121 = vmatprep.subr.mxu0 0.0
    %1122 = vmatpush1.msra.mxu0 0.0
    %1123 = vmatprep.subr.mxu0 0.0
    %1124 = vmatpush1.msra.mxu0 0.0
    %1125 = vmatprep.subr.mxu0 0.0
    %1126 = vmatpush1.msra.mxu0 0.0
    %1127 = vmatprep.subr.mxu0 0.0
    %1128 = vmatpush1.msra.mxu0 0.0
    %1129 = vmatprep.subr.mxu0 0.0
    %1130 = vmatpush1.msra.mxu0 0.0
    %1131 = vmatprep.subr.mxu0 0.0
    %1132 = vmatpush1.msra.mxu0 0.0
    %1133 = vmatprep.subr.mxu0 0.0
    %1134 = vmatpush1.msra.mxu0 0.0
    %1135 = vmatprep.subr.mxu0 0.0
    %1136 = vmatpush1.msra.mxu0 0.0
    %1137 = vmatprep.subr.mxu0 0.0
    %1138 = vmatpush1.msra.mxu0 0.0
    %1139 = vmatprep.subr.mxu0 0.0
    %1140 = vmatpush1.msra.mxu0 0.0
    %1141 = vmatprep.subr.mxu0 0.0
    %1142 = vmatpush1.msra.mxu0 0.0
    %1143 = vmatprep.subr.mxu0 0.0
    %1144 = vmatpush1.msra.mxu0 0.0
    %1145 = vmatprep.subr.mxu0 0.0
    %1146 = vmatpush1.msra.mxu0 0.0
    %1147 = vmatprep.subr.mxu0 0.0
    %1148 = vmatpush1.msra.mxu0 0.0
    %1149 = vmatprep.subr.mxu0 0.0
    %1150 = vmatpush1.msra.mxu0 0.0
    %1151 = vmatprep.subr.mxu0 0.0
    %1152 = vmatpush1.msra.mxu0 0.0
    %1153 = vmatprep.subr.mxu0 0.0
    %1154 = vmatpush1.msra.mxu0 0.0
    %1155 = vmatprep.subr.mxu0 0.0
    %1156 = vmatpush1.msra.mxu0 0.0
    %1157 = vmatprep.subr.mxu0 0.0
    %1158 = vmatpush1.msra.mxu0 0.0
    %1159 = vmatprep.subr.mxu0 0.0
    %1160 = vmatpush1.msra.mxu0 0.0
    %1161 = vmatprep.subr.mxu0 0.0
    %1162 = vmatpush1.msra.mxu0 0.0
    %1163 = vmatprep.mubr.f32.mxu0 0.0
    %1164 = vmatmul.mubr.f32.gmra.mrb[0].mxu0 %v1097
    %v1165 = vpop.f32.mrb[0].mxu0
    %v1166 = vadd.f32 0.0, %v1165
    %v1167 = vpop.f32.mrb[0].mxu0
    %v1168 = vadd.f32 0.0, %v1167
    %1169 = vdwg.mxu0
    %v1170 = vadd.f32 %v1094, %v1166
    %v1171 = vadd.f32 %v1095, %v1168
    %v1172 = vtanh.pop %v1170
    %v1173 = vxor.u32 %v1170, 2147483648
    %v1174 = vmul.f32 %v1173, 1.442695
    %v1175 = vpow.pop %v1174
    %v1176 = vadd.f32 %v1175, 1.0
    %v1177 = vrcp.pop %v1176
    %v1178 = vmul.f32 1.0, %v1177
    %v1179 = vtanh.pop %v1171
    %v1180 = vxor.u32 %v1171, 2147483648
    %v1181 = vmul.f32 %v1180, 1.442695
    %v1182 = vpow.pop %v1181
    %v1183 = vadd.f32 %v1182, 1.0
    %v1184 = vrcp.pop %v1183
    %v1185 = vmul.f32 1.0, %v1184
    %1187 = vrot.lane.b32.xlu0 %v1082, 64
    %v1188 = vpop.permute.xlu0 %1187
    %v1190 = vmul.f32 %v1178, %v1188
    %1192 = vrot.lane.b32.xlu0 %v1172, 32
    %v1193 = vpop.permute.xlu0 %1192
    %v1195 = vmul.f32 %v1178, %v1193
    %1197 = vrot.lane.b32.xlu0 %v1195, 32
    %v1198 = vpop.permute.xlu0 %1197
    %v1200 = vadd.f32 %v1190, %v1198
    %1201 = vrot.lane.b32.xlu0 %v1082, 32
    %v1202 = vpop.permute.xlu0 %1201
    %v1204 = vmul.f32 %v1185, %v1202
    %1206 = vrot.lane.b32.xlu0 %v1179, 32
    %v1207 = vpop.permute.xlu0 %1206
    %v1209 = vmul.f32 %v1185, %v1207
    %1211 = vrot.lane.b32.xlu0 %v1209, 32
    %v1212 = vpop.permute.xlu0 %1211
    %v1214 = vadd.f32 %v1204, %v1212
    %1216 = vrot.lane.b32.xlu0 %v1200, 64
    %v1217 = vpop.permute.xlu0 %1216
    %1220 = vrot.lane.b32.xlu0 %v1214, 96
    %v1221 = vpop.permute.xlu0 %1220
    %v1223 = vsel %vm76, %v1217, %v1221
    %1225 = vrot.lane.b32.xlu0 %v1178, 32
    %v1226 = vpop.permute.xlu0 %1225
    %1229 = vrot.lane.b32.xlu0 %v1185, 64
    %v1230 = vpop.permute.xlu0 %1229
    %v1232 = vsel %vm76, %v1226, %v1230
    %v1233 = vtanh.pop %v1223
    %v1234 = vmul.f32 %v1232, %v1233
    %v1235 = vld [vmem:[%s236] sm:$0xff]
    %v1236 = vld [vmem:[%s232 + $0x8] sm:$0xff]
    %v1238 = vsel %vm238, %v1234, 0
    %1240 = vmatprep.subr.mxu0 %v42
    %1241 = vmatpush1.msra.mxu0 %v41
    %1242 = vmatprep.subr.mxu0 %v44
    %1243 = vmatpush1.msra.mxu0 %v43
    %1244 = vmatprep.subr.mxu0 %v46
    %1245 = vmatpush1.msra.mxu0 %v45
    %1246 = vmatprep.subr.mxu0 %v48
    %1247 = vmatpush1.msra.mxu0 %v47
    %1248 = vmatprep.subr.mxu0 %v50
    %1249 = vmatpush1.msra.mxu0 %v49
    %1250 = vmatprep.subr.mxu0 %v52
    %1251 = vmatpush1.msra.mxu0 %v51
    %1252 = vmatprep.subr.mxu0 %v54
    %1253 = vmatpush1.msra.mxu0 %v53
    %1254 = vmatprep.subr.mxu0 %v56
    %1255 = vmatpush1.msra.mxu0 %v55
    %1256 = vmatprep.subr.mxu0 0.0
    %1257 = vmatpush1.msra.mxu0 0.0
    %1258 = vmatprep.subr.mxu0 0.0
    %1259 = vmatpush1.msra.mxu0 0.0
    %1260 = vmatprep.subr.mxu0 0.0
    %1261 = vmatpush1.msra.mxu0 0.0
    %1262 = vmatprep.subr.mxu0 0.0
    %1263 = vmatpush1.msra.mxu0 0.0
    %1264 = vmatprep.subr.mxu0 0.0
    %1265 = vmatpush1.msra.mxu0 0.0
    %1266 = vmatprep.subr.mxu0 0.0
    %1267 = vmatpush1.msra.mxu0 0.0
    %1268 = vmatprep.subr.mxu0 0.0
    %1269 = vmatpush1.msra.mxu0 0.0
    %1270 = vmatprep.subr.mxu0 0.0
    %1271 = vmatpush1.msra.mxu0 0.0
    %1272 = vmatprep.subr.mxu0 0.0
    %1273 = vmatpush1.msra.mxu0 0.0
    %1274 = vmatprep.subr.mxu0 0.0
    %1275 = vmatpush1.msra.mxu0 0.0
    %1276 = vmatprep.subr.mxu0 0.0
    %1277 = vmatpush1.msra.mxu0 0.0
    %1278 = vmatprep.subr.mxu0 0.0
    %1279 = vmatpush1.msra.mxu0 0.0
    %1280 = vmatprep.subr.mxu0 0.0
    %1281 = vmatpush1.msra.mxu0 0.0
    %1282 = vmatprep.subr.mxu0 0.0
    %1283 = vmatpush1.msra.mxu0 0.0
    %1284 = vmatprep.subr.mxu0 0.0
    %1285 = vmatpush1.msra.mxu0 0.0
    %1286 = vmatprep.subr.mxu0 0.0
    %1287 = vmatpush1.msra.mxu0 0.0
    %1288 = vmatprep.subr.mxu0 0.0
    %1289 = vmatpush1.msra.mxu0 0.0
    %1290 = vmatprep.subr.mxu0 0.0
    %1291 = vmatpush1.msra.mxu0 0.0
    %1292 = vmatprep.subr.mxu0 0.0
    %1293 = vmatpush1.msra.mxu0 0.0
    %1294 = vmatprep.subr.mxu0 0.0
    %1295 = vmatpush1.msra.mxu0 0.0
    %1296 = vmatprep.subr.mxu0 0.0
    %1297 = vmatpush1.msra.mxu0 0.0
    %1298 = vmatprep.subr.mxu0 0.0
    %1299 = vmatpush1.msra.mxu0 0.0
    %1300 = vmatprep.subr.mxu0 0.0
    %1301 = vmatpush1.msra.mxu0 0.0
    %1302 = vmatprep.subr.mxu0 0.0
    %1303 = vmatpush1.msra.mxu0 0.0
    %1304 = vmatprep.mubr.f32.mxu0 0.0
    %1305 = vmatmul.mubr.f32.gmra.mrb[0].mxu0 %v1238
    %v1306 = vpop.f32.mrb[0].mxu0
    %v1307 = vadd.f32 0.0, %v1306
    %v1308 = vpop.f32.mrb[0].mxu0
    %v1309 = vadd.f32 0.0, %v1308
    %1310 = vdwg.mxu0
    %v1311 = vadd.f32 %v1235, %v1307
    %v1312 = vadd.f32 %v1236, %v1309
    %v1313 = vtanh.pop %v1311
    %v1314 = vxor.u32 %v1311, 2147483648
    %v1315 = vmul.f32 %v1314, 1.442695
    %v1316 = vpow.pop %v1315
    %v1317 = vadd.f32 %v1316, 1.0
    %v1318 = vrcp.pop %v1317
    %v1319 = vmul.f32 1.0, %v1318
    %v1320 = vtanh.pop %v1312
    %v1321 = vxor.u32 %v1312, 2147483648
    %v1322 = vmul.f32 %v1321, 1.442695
    %v1323 = vpow.pop %v1322
    %v1324 = vadd.f32 %v1323, 1.0
    %v1325 = vrcp.pop %v1324
    %v1326 = vmul.f32 1.0, %v1325
    %1328 = vrot.lane.b32.xlu0 %v1223, 64
    %v1329 = vpop.permute.xlu0 %1328
    %v1331 = vmul.f32 %v1319, %v1329
    %1333 = vrot.lane.b32.xlu0 %v1313, 32
    %v1334 = vpop.permute.xlu0 %1333
    %v1336 = vmul.f32 %v1319, %v1334
    %1338 = vrot.lane.b32.xlu0 %v1336, 32
    %v1339 = vpop.permute.xlu0 %1338
    %v1341 = vadd.f32 %v1331, %v1339
    %1342 = vrot.lane.b32.xlu0 %v1223, 32
    %v1343 = vpop.permute.xlu0 %1342
    %v1345 = vmul.f32 %v1326, %v1343
    %1347 = vrot.lane.b32.xlu0 %v1320, 32
    %v1348 = vpop.permute.xlu0 %1347
    %v1350 = vmul.f32 %v1326, %v1348
    %1352 = vrot.lane.b32.xlu0 %v1350, 32
    %v1353 = vpop.permute.xlu0 %1352
    %v1355 = vadd.f32 %v1345, %v1353
    %1357 = vrot.lane.b32.xlu0 %v1341, 64
    %v1358 = vpop.permute.xlu0 %1357
    %1361 = vrot.lane.b32.xlu0 %v1355, 96
    %v1362 = vpop.permute.xlu0 %1361
    %v1364 = vsel %vm76, %v1358, %v1362
    %1366 = vrot.lane.b32.xlu0 %v1319, 32
    %v1367 = vpop.permute.xlu0 %1366
    %1370 = vrot.lane.b32.xlu0 %v1326, 64
    %v1371 = vpop.permute.xlu0 %1370
    %v1373 = vsel %vm76, %v1367, %v1371
    %v1374 = vtanh.pop %v1364
    %v1375 = vmul.f32 %v1373, %v1374
    %1376 = vst.msk [vmem:[#allocation6] sm:$0xff] %vm238, %v1375
    // Predicated region
    $region22: #{tpu_custom_call.1} parent=1 // pred_check
      _
    $region23: #{tpu_custom_call.1} parent=1 // pred_check_branch
      %1378 = sbr.rel (0) target = $region25
    $region24: #{tpu_custom_call.1} parent=1 // pred_region
      %s1380 = ssub.s32 128, 128
      %1381 = vsyncadd [#allocation5], %s1380
      %s1383 = sshll.u32 [#allocation6], 4
      %s1384 = int_to_ptr.vmem [resolvable:$true] %s1383
      %1386 = dma.vmem_to_hbm [thread:$0]  %s1384, 128, %s4, [#allocation5]
    $region25: #{tpu_custom_call.1} parent=1 // pred_fallthru
      _
    // Predicated region
    $region26: #{tpu_custom_call.1} parent=1 // pred_check
      _
    $region27: #{tpu_custom_call.1} parent=1 // pred_check_branch
      %1388 = sbr.rel (0) target = $region29
    $region28: #{tpu_custom_call.1} parent=1 // pred_region
      %1389 = dma.done [#allocation5], 128
    $region29: #{tpu_custom_call.1} parent=1 // pred_fallthru
      _
    %1390 = vsyncpa [#allocation4], 1
    %1391 = vsyncpa [#allocation5], 1

</llo_original>
